<compile_context>
chip_gen: v5e
topology: v5e:2x2
jax: 0.10.0
libtpu: 0.0.40
codegen_flags: <defaults>
</compile_context>

<pallas_src>
import jax
import jax.numpy as jnp
from jax.experimental import pallas as pl
from jax.experimental.pallas import tpu as pltpu


TIME_CHUNK = 64                    # timesteps per grid step (review: 32-64)
VMEM_LIMIT = 64 * 1024 * 1024      # raised scoped-VMEM limit for all kernels


# ----------------------------------------------------------------------------
# Kernel 1: input-side GEMM, all (layer, direction) groups fused.
#   gx = [x_fwd | x_bwd] @ W_in + b_in,  columns already gate-major so kernel 2
#   consumes the result directly (no XLA transpose between kernels 1 and 2).
#   Row-tiled over the flattened (T*B) stream ("parallel").
# ----------------------------------------------------------------------------
def _input_gates_kernel(x_ref, w_ref, b_ref, gx_ref):
    y = jnp.dot(x_ref[...], w_ref[...], preferred_element_type=jnp.float32)
    gx_ref[...] = (y + b_ref[...]).astype(gx_ref.dtype)


# ----------------------------------------------------------------------------
# Kernel 2: fused recurrence for ALL 2*num_layers groups at once.
#   gx_ref    : (Tc, BP, 4*G*H)  bf16 precomputed input gates, gate-major lanes
#   w_bd_ref  : (G*H, 4*G*H)     bf16 block-diagonal recurrent weight
#   len_ref   : (BP, 1)          int32 sequence lengths (mask folded in here)
#   h_out_ref : (Tc, BP, G*H)    bf16 hidden states, zeroed at t >= length
#   h_scr/c_scr : (BP, G*H) f32  state carried across time chunks
# ----------------------------------------------------------------------------
def _sigmoid_eup(z):
    # sigmoid = 1 / (1 + exp(-z)); approximate reciprocal runs on the EUP slot
    return pl.reciprocal(1.0 + jnp.exp(-z), approx=True)


def _fused_lstm_kernel(gx_ref, w_bd_ref, len_ref, h_out_ref, h_scr, c_scr):
    tc = gx_ref.shape[0]
    GH = h_scr.shape[1]
    t_base = pl.program_id(0) * tc

    @pl.when(pl.program_id(0) == 0)
    def _():
        h_scr[...] = jnp.zeros_like(h_scr)
        c_scr[...] = jnp.zeros_like(c_scr)

    w_bd = w_bd_ref[...]          # bf16, loaded once per chunk
    lens = len_ref[...]           # (BP, 1) int32

    def step(t, carry):
        h, c = carry              # f32 carry (accuracy over the recurrence)
        # one (BP, GH) x (GH, 4GH) bf16 matmul covers every layer/direction
        gates = gx_ref[t].astype(jnp.float32) + jnp.dot(
            h.astype(jnp.bfloat16), w_bd, preferred_element_type=jnp.float32)
        # gate-major layout -> each slice is a lane-aligned GH-wide block
        i_g = _sigmoid_eup(gates[:, 0 * GH:1 * GH])
        f_g = _sigmoid_eup(gates[:, 1 * GH:2 * GH])
        g_g = jnp.tanh(gates[:, 2 * GH:3 * GH])
        o_g = _sigmoid_eup(gates[:, 3 * GH:4 * GH])
        c_new = f_g * c + i_g * g_g
        h_new = o_g * jnp.tanh(c_new)
        # pack_padded / pad_packed semantics: zero hidden output at t >= length
        # (only the store is masked; the carry is off the masked path)
        valid = (t_base + t < lens).astype(jnp.float32)       # (BP, 1)
        h_out_ref[t] = (h_new * valid).astype(h_out_ref.dtype)
        return h_new, c_new

    h_fin, c_fin = jax.lax.fori_loop(0, tc, step, (h_scr[...], c_scr[...]),
                                     unroll=True)
    h_scr[...] = h_fin
    c_scr[...] = c_fin


# ----------------------------------------------------------------------------
# Kernel 3: projection GEMM, all groups fused via block-diagonal W_p.
#   out = h_all @ W_p_bd + b_p   (lane-dense G*P output columns; h_all is read
#   in its native layout, no regroup/transposes between kernels 2 and 3).
# ----------------------------------------------------------------------------
def _proj_kernel(h_ref, w_ref, b_ref, out_ref):
    y = jnp.dot(h_ref[...], w_ref[...], preferred_element_type=jnp.float32)
    out_ref[...] = (y + b_ref[...]).astype(out_ref.dtype)


# ----------------------------------------------------------------------------
# Full ELMoLstmEncoder.forward
# ----------------------------------------------------------------------------
def elmo_lstm_encoder(inputs, lengths, params):
    B, T, D = inputs.shape
    L = len(params)
    G = 2 * L                                     # (layer, direction) groups
    H = params[0]["fwd"]["w_hh"].shape[1]
    P = params[0]["fwd"]["w_p"].shape[0]
    GH = G * H
    GP = G * P

    lengths = lengths.astype(jnp.int32)
    pos = jnp.arange(T, dtype=jnp.int32)[None, :]               # (1, T)
    lens = lengths[:, None]                                     # (B, 1)
    # rev_idx[b, t] = len[b]-1-t for t < len[b], else t (identity on padding)
    rev_idx = jnp.where(pos < lens, lens - 1 - pos, pos)        # (B, T)
    rev_inputs = jnp.take_along_axis(inputs, rev_idx[:, :, None], axis=1)

    # pad batch to a sublane multiple and time to a TIME_CHUNK multiple
    BP = max(8, -(-B // 8) * 8)
    tc = min(TIME_CHUNK, T)
    T_pad = pl.cdiv(T, tc) * tc
    n_chunks = T_pad // tc
    rows = tc * BP                                   # stream-row tile size

    def to_time_major(x):                            # (B,T,D) -> (T_pad,BP,D)
        x = jnp.pad(x, ((0, BP - B), (0, T_pad - T), (0, 0)))
        return jnp.transpose(x, (1, 0, 2))

    # direction-concatenated, time-major, flattened input stream (bf16)
    x_cat = jnp.concatenate([to_time_major(inputs), to_time_major(rev_inputs)],
                            axis=-1)                            # (T_pad,BP,2D)
    x_cat = x_cat.astype(jnp.bfloat16).reshape(T_pad * BP, 2 * D)

    lens_col = jnp.pad(lengths, (0, BP - B)).reshape(BP, 1)     # (BP,1) int32

    # stacked per-group parameters; group order g = direction*L + layer
    group_params = [params[l][d] for d in ("fwd", "bwd") for l in range(L)]

    # input weight (2D, 4*G*H): gate-major columns, rows zero-padded so fwd
    # groups read x[:, :D] and bwd groups read x[:, D:]
    w_ih_g = jnp.stack([p["w_ih"].T.reshape(D, 4, H) for p in group_params])
    dir_sel = (jnp.arange(G) // L == jnp.arange(2)[:, None]).astype(
        w_ih_g.dtype)                                           # (2, G)
    w_in = jnp.einsum("grkj,eg->erkgj", w_ih_g, dir_sel
                      ).reshape(2 * D, 4 * GH).astype(jnp.bfloat16)
    # TODO(synk): per-direction dense weights would avoid the 2x zero-block
    # FLOPs at production D; negligible at demo size.

    b_gate = jnp.stack([(p["b_ih"] + p["b_hh"]).reshape(4, H)
                        for p in group_params])                 # (G,4,H)
    b_gate = jnp.transpose(b_gate, (1, 0, 2)).reshape(1, 4 * GH)  # gate-major

    # block-diagonal recurrent weight (G*H, 4*G*H), gate-major columns
    w_hh_g = jnp.stack([p["w_hh"].T.reshape(H, 4, H) for p in group_params])
    eye_g = jnp.eye(G, dtype=w_hh_g.dtype)
    w_bd = jnp.einsum("gmkj,gf->gmkfj", w_hh_g, eye_g
                      ).reshape(GH, 4 * GH).astype(jnp.bfloat16)

    # block-diagonal projection weight (G*H, G*P) + concatenated bias
    w_p_g = jnp.stack([p["w_p"].T for p in group_params])       # (G,H,P)
    w_p_bd = jnp.einsum("ghp,gf->ghfp", w_p_g, eye_g
                        ).reshape(GH, GP).astype(jnp.bfloat16)
    b_p_cat = jnp.concatenate([p["b_p"] for p in group_params]).reshape(1, GP)

    # ---- kernel 1: row-tiled input GEMM (parallel grid) ---------------------
    gx = pl.pallas_call(
        _input_gates_kernel,
        out_shape=jax.ShapeDtypeStruct((T_pad * BP, 4 * GH), jnp.bfloat16),
        grid=(n_chunks,),
        in_specs=[
            pl.BlockSpec((rows, 2 * D), lambda r: (r, 0)),       # x row tile
            pl.BlockSpec((2 * D, 4 * GH), lambda r: (0, 0)),     # W_in
            pl.BlockSpec((1, 4 * GH), lambda r: (0, 0)),         # bias
        ],
        out_specs=pl.BlockSpec((rows, 4 * GH), lambda r: (r, 0)),
        compiler_params=pltpu.CompilerParams(
            dimension_semantics=("parallel",),
            vmem_limit_bytes=VMEM_LIMIT),
    )(x_cat, w_in, b_gate)

    # free (bitcast) reshape to the (time, batch, lanes) view for kernel 2
    gx = gx.reshape(T_pad, BP, 4 * GH)

    # ---- kernel 2: fused recurrence over time chunks (sequential) -----------
    h_all = pl.pallas_call(
        _fused_lstm_kernel,
        out_shape=jax.ShapeDtypeStruct((T_pad, BP, GH), jnp.bfloat16),
        grid=(n_chunks,),
        in_specs=[
            pl.BlockSpec((tc, BP, 4 * GH), lambda c: (c, 0, 0)),  # gx chunk
            pl.BlockSpec((GH, 4 * GH), lambda c: (0, 0)),         # W_bd
            pl.BlockSpec((BP, 1), lambda c: (0, 0)),              # lengths
        ],
        out_specs=pl.BlockSpec((tc, BP, GH), lambda c: (c, 0, 0)),
        scratch_shapes=[pltpu.VMEM((BP, GH), jnp.float32),        # h carry
                        pltpu.VMEM((BP, GH), jnp.float32)],       # c carry
        compiler_params=pltpu.CompilerParams(
            dimension_semantics=("arbitrary",),     # sequential recurrence
            vmem_limit_bytes=VMEM_LIMIT),
    )(gx, w_bd, lens_col)

    # ---- kernel 3: row-tiled, lane-dense projection GEMM (parallel grid) ----
    proj = pl.pallas_call(
        _proj_kernel,
        out_shape=jax.ShapeDtypeStruct((T_pad * BP, GP), jnp.float32),
        grid=(n_chunks,),
        in_specs=[
            pl.BlockSpec((rows, GH), lambda r: (r, 0)),           # hidden rows
            pl.BlockSpec((GH, GP), lambda r: (0, 0)),             # W_p (bdiag)
            pl.BlockSpec((1, GP), lambda r: (0, 0)),              # b_p
        ],
        out_specs=pl.BlockSpec((rows, GP), lambda r: (r, 0)),
        compiler_params=pltpu.CompilerParams(
            dimension_semantics=("parallel",),
            vmem_limit_bytes=VMEM_LIMIT),
    )(h_all.reshape(T_pad * BP, GH), w_p_bd, b_p_cat)

    # final small layout fix-up: drop padding, go batch-major, split groups
    out_btp = jnp.transpose(proj.reshape(T_pad, BP, GP)[:T, :B], (1, 0, 2))

    stacked_forward_states = [out_btp[..., l * P:(l + 1) * P] for l in range(L)]
    stacked_backward_states = [
        jnp.take_along_axis(out_btp[..., (L + l) * P:(L + l + 1) * P],
                            rev_idx[:, :, None], axis=1)
        for l in range(L)]
    return stacked_forward_states, stacked_backward_states


# ----------------------------------------------------------------------------
# Deterministic parameter init (mirrors nn.LSTM / nn.Linear shapes)
# ----------------------------------------------------------------------------
def init_params(key, input_dim, hidden_dim, num_layers):
    params = []
    k = 1.0 / jnp.sqrt(jnp.float32(hidden_dim))
    lstm_input_dim = input_dim
    for _ in range(num_layers):
        layer = {}
        for direction in ("fwd", "bwd"):
            key, k0, k1, k2, k3, k4, k5 = jax.random.split(key, 7)
            layer[direction] = dict(
                w_ih=jax.random.uniform(k0, (4 * hidden_dim, lstm_input_dim),
                                        jnp.float32, -k, k),
                w_hh=jax.random.uniform(k1, (4 * hidden_dim, hidden_dim),
                                        jnp.float32, -k, k),
                b_ih=jax.random.uniform(k2, (4 * hidden_dim,),
                                        jnp.float32, -k, k),
                b_hh=jax.random.uniform(k3, (4 * hidden_dim,),
                                        jnp.float32, -k, k),
                w_p=jax.random.uniform(k4, (input_dim, hidden_dim),
                                       jnp.float32, -k, k),
                b_p=jax.random.uniform(k5, (input_dim,),
                                       jnp.float32, -k, k),
            )
        params.append(layer)
        lstm_input_dim = input_dim  # projection_dim == input_dim
    return params


# ----------------------------------------------------------------------------
# Pure-JAX reference (lax.scan, f32) for correctness check
# ----------------------------------------------------------------------------
def _ref_lstm_projection(x, lengths, p):
    B, T, D = x.shape
    H = p["w_hh"].shape[1]
    bias = p["b_ih"] + p["b_hh"]

    def step(carry, x_t):
        h, c = carry
        gates = x_t @ p["w_ih"].T + h @ p["w_hh"].T + bias
        i, f, g, o = jnp.split(gates, 4, axis=-1)
        c = jax.nn.sigmoid(f) * c + jax.nn.sigmoid(i) * jnp.tanh(g)
        h = jax.nn.sigmoid(o) * jnp.tanh(c)
        return (h, c), h

    init = (jnp.zeros((B, H), jnp.float32), jnp.zeros((B, H), jnp.float32))
    _, hs = jax.lax.scan(step, init, jnp.transpose(x, (1, 0, 2)))
    hs = jnp.transpose(hs, (1, 0, 2))
    mask = (jnp.arange(T)[None, :] < lengths[:, None])[:, :, None]
    hs = jnp.where(mask, hs, 0.0)
    return hs @ p["w_p"].T + p["b_p"]


def _ref_encoder(inputs, lengths, params):
    B, T, D = inputs.shape
    pos = jnp.arange(T, dtype=jnp.int32)[None, :]
    lens = lengths.astype(jnp.int32)[:, None]
    rev_idx = jnp.where(pos < lens, lens - 1 - pos, pos)
    rev_inputs = jnp.take_along_axis(inputs, rev_idx[:, :, None], axis=1)
    fwd_states, bwd_states = [], []
    for layer_p in params:
        f = _ref_lstm_projection(inputs, lengths, layer_p["fwd"])
        b = _ref_lstm_projection(rev_inputs, lengths, layer_p["bwd"])
        fwd_states.append(f)
        bwd_states.append(jnp.take_along_axis(b, rev_idx[:, :, None], axis=1))
    return fwd_states, bwd_states


if __name__ == "__main__":
    key = jax.random.PRNGKey(0)
    B, T, INPUT_DIM, HIDDEN_DIM, NUM_LAYERS = 2, 8, 32, 32, 2

    key, k_in = jax.random.split(key)
    inputs = jax.random.normal(k_in, (B, T, INPUT_DIM), dtype=jnp.float32)
    lengths = jnp.array([8, 5], dtype=jnp.int32)   # variable lengths, padded

    params = init_params(key, INPUT_DIM, HIDDEN_DIM, NUM_LAYERS)

    encoder = jax.jit(elmo_lstm_encoder)
    fwd_states, bwd_states = encoder(inputs, lengths, params)
    jax.block_until_ready(fwd_states)
    jax.block_until_ready(bwd_states)

    # sanity-check against the f32 pure-JAX reference; tolerance accounts for
    # bf16 MXU operands / bf16 intermediates / approximate EUP reciprocal.
    ref_fwd, ref_bwd = _ref_encoder(inputs, lengths, params)
    for got, ref in zip(fwd_states + bwd_states, ref_fwd + ref_bwd):
        assert got.shape == (B, T, INPUT_DIM)
        err = float(jnp.max(jnp.abs(got - ref)))
        assert err < 1e-1, f"mismatch vs reference: {err}"

    print("KERNEL_OK")
</pallas_src>

<mosaic_0001>
module attributes {stable_mosaic.version = 11 : i64} {
  func.func @_input_gates_kernel(%arg0: i32, %arg1: memref<64x64xbf16, #tpu.memory_space<vmem>>, %arg2: memref<64x512xbf16, #tpu.memory_space<vmem>>, %arg3: memref<1x512xf32, #tpu.memory_space<vmem>>, %arg4: memref<64x512xbf16, #tpu.memory_space<vmem>>) attributes {dimension_semantics = [#tpu.dimension_semantics<parallel>], iteration_bounds = array<i64: 1>, scalar_prefetch = 0 : i64, scratch_operands = 0 : i64, tpu.core_type = #tpu.core_type<tc>, window_params = [{transform_indices = @transform_0, window_bounds = array<i64: 64, 64>}, {pipeline_mode = #tpu.pipeline_mode<synchronous>, transform_indices = @transform_1, window_bounds = array<i64: 64, 512>}, {pipeline_mode = #tpu.pipeline_mode<synchronous>, transform_indices = @transform_2, window_bounds = array<i64: 1, 512>}, {transform_indices = @transform_3, window_bounds = array<i64: 64, 512>}]} {
    %c0 = arith.constant 0 : index
    %c0_0 = arith.constant 0 : index
    %0 = vector.load %arg1[%c0, %c0_0] : memref<64x64xbf16, #tpu.memory_space<vmem>>, vector<64x64xbf16>
    %c0_1 = arith.constant 0 : index
    %c0_2 = arith.constant 0 : index
    %1 = vector.load %arg2[%c0_1, %c0_2] : memref<64x512xbf16, #tpu.memory_space<vmem>>, vector<64x512xbf16>
    %cst = arith.constant dense<0.000000e+00> : vector<64x512xf32>
    %2 = tpu.matmul %0, %1, %cst {dimension_numbers = #tpu.dot_dimension_numbers<[1], [0], [0], [1], [0, 0, 1, 1], [], []>} : vector<64x64xbf16>, vector<64x512xbf16>, vector<64x512xf32> -> vector<64x512xf32>
    %c0_3 = arith.constant 0 : index
    %c0_4 = arith.constant 0 : index
    %3 = vector.load %arg3[%c0_3, %c0_4] : memref<1x512xf32, #tpu.memory_space<vmem>>, vector<1x512xf32>
    %4 = vector.broadcast %3 : vector<1x512xf32> to vector<64x512xf32>
    %5 = arith.addf %2, %4 : vector<64x512xf32>
    %6 = arith.truncf %5 : vector<64x512xf32> to vector<64x512xbf16>
    %c0_5 = arith.constant 0 : index
    %c0_6 = arith.constant 0 : index
    %7 = vector.load %arg4[%c0_5, %c0_6] : memref<64x512xbf16, #tpu.memory_space<vmem>>, vector<64x512xbf16>
    tpu.vector_store %arg4[%c0_5, %c0_6], %6 {strides = array<i32>} : memref<64x512xbf16, #tpu.memory_space<vmem>>, vector<64x512xbf16>,
    return
  }
  func.func @transform_0(%arg0: i32) -> (i32, i32) {
    %c0_i32 = arith.constant 0 : i32
    %c0_i32_0 = arith.constant 0 : i32
    return %arg0, %c0_i32 : i32, i32
  }
  func.func @transform_1(%arg0: i32) -> (i32, i32) {
    %c0_i32 = arith.constant 0 : i32
    %c0_i32_0 = arith.constant 0 : i32
    %c0_i32_1 = arith.constant 0 : i32
    return %c0_i32, %c0_i32_0 : i32, i32
  }
  func.func @transform_2(%arg0: i32) -> (i32, i32) {
    %c0_i32 = arith.constant 0 : i32
    %c0_i32_0 = arith.constant 0 : i32
    %c0_i32_1 = arith.constant 0 : i32
    return %c0_i32, %c0_i32_0 : i32, i32
  }
  func.func @transform_3(%arg0: i32) -> (i32, i32) {
    %c0_i32 = arith.constant 0 : i32
    %c0_i32_0 = arith.constant 0 : i32
    return %arg0, %c0_i32 : i32, i32
  }
}

module attributes {stable_mosaic.version = 11 : i64} {
  func.func @_fused_lstm_kernel(%arg0: i32, %arg1: memref<8x8x512xbf16, #tpu.memory_space<vmem>>, %arg2: memref<128x512xbf16, #tpu.memory_space<vmem>>, %arg3: memref<8x1xi32, #tpu.memory_space<vmem>>, %arg4: memref<8x8x128xbf16, #tpu.memory_space<vmem>>, %arg5: memref<8x128xf32, #tpu.memory_space<vmem>>, %arg6: memref<8x128xf32, #tpu.memory_space<vmem>>) attributes {dimension_semantics = [#tpu.dimension_semantics<arbitrary>], iteration_bounds = array<i64: 1>, scalar_prefetch = 0 : i64, scratch_operands = 2 : i64, tpu.core_type = #tpu.core_type<tc>, window_params = [{transform_indices = @transform_0, window_bounds = array<i64: 8, 8, 512>}, {pipeline_mode = #tpu.pipeline_mode<synchronous>, transform_indices = @transform_1, window_bounds = array<i64: 128, 512>}, {pipeline_mode = #tpu.pipeline_mode<synchronous>, transform_indices = @transform_2, window_bounds = array<i64: 8, 1>}, {transform_indices = @transform_3, window_bounds = array<i64: 8, 8, 128>}]} {
    %c8_i32 = arith.constant 8 : i32
    %0 = arith.muli %arg0, %c8_i32 : i32
    %c0_i32 = arith.constant 0 : i32
    %1 = arith.cmpi eq, %arg0, %c0_i32 : i32
    %2 = arith.extui %1 : i1 to i32
    %c0_i32_0 = arith.constant 0 : i32
    %3 = arith.cmpi ne, %2, %c0_i32_0 : i32
    scf.if %3 {
      %cst_101 = arith.constant 0.000000e+00 : f32
      %386 = vector.broadcast %cst_101 : f32 to vector<8x128xf32>
      %c0_102 = arith.constant 0 : index
      %c0_103 = arith.constant 0 : index
      %387 = vector.load %arg5[%c0_102, %c0_103] : memref<8x128xf32, #tpu.memory_space<vmem>>, vector<8x128xf32>
      tpu.vector_store %arg5[%c0_102, %c0_103], %386 {strides = array<i32>} : memref<8x128xf32, #tpu.memory_space<vmem>>, vector<8x128xf32>,
      %cst_104 = arith.constant 0.000000e+00 : f32
      %388 = vector.broadcast %cst_104 : f32 to vector<8x128xf32>
      %c0_105 = arith.constant 0 : index
      %c0_106 = arith.constant 0 : index
      %389 = vector.load %arg6[%c0_105, %c0_106] : memref<8x128xf32, #tpu.memory_space<vmem>>, vector<8x128xf32>
      tpu.vector_store %arg6[%c0_105, %c0_106], %388 {strides = array<i32>} : memref<8x128xf32, #tpu.memory_space<vmem>>, vector<8x128xf32>,
    } else {
    }
    %c0 = arith.constant 0 : index
    %c0_1 = arith.constant 0 : index
    %4 = vector.load %arg2[%c0, %c0_1] : memref<128x512xbf16, #tpu.memory_space<vmem>>, vector<128x512xbf16>
    %c0_2 = arith.constant 0 : index
    %c0_3 = arith.constant 0 : index
    %5 = vector.load %arg3[%c0_2, %c0_3] : memref<8x1xi32, #tpu.memory_space<vmem>>, vector<8x1xi32>
    %c0_4 = arith.constant 0 : index
    %c0_5 = arith.constant 0 : index
    %6 = vector.load %arg5[%c0_4, %c0_5] : memref<8x128xf32, #tpu.memory_space<vmem>>, vector<8x128xf32>
    %c0_6 = arith.constant 0 : index
    %c0_7 = arith.constant 0 : index
    %7 = vector.load %arg6[%c0_6, %c0_7] : memref<8x128xf32, #tpu.memory_space<vmem>>, vector<8x128xf32>
    %c0_i32_8 = arith.constant 0 : i32
    %8 = arith.index_cast %c0_i32_8 : i32 to index
    %c0_9 = arith.constant 0 : index
    %c0_10 = arith.constant 0 : index
    %9 = vector.load %arg1[%8, %c0_9, %c0_10] : memref<8x8x512xbf16, #tpu.memory_space<vmem>>, vector<1x8x512xbf16>
    %10 = vector.shape_cast %9 : vector<1x8x512xbf16> to vector<8x512xbf16>
    %11 = arith.extf %10 : vector<8x512xbf16> to vector<8x512xf32>
    %12 = arith.truncf %6 : vector<8x128xf32> to vector<8x128xbf16>
    %cst = arith.constant dense<0.000000e+00> : vector<8x512xf32>
    %13 = tpu.matmul %12, %4, %cst {dimension_numbers = #tpu.dot_dimension_numbers<[1], [0], [0], [1], [0, 0, 1, 1], [], []>} : vector<8x128xbf16>, vector<128x512xbf16>, vector<8x512xf32> -> vector<8x512xf32>
    %14 = arith.addf %11, %13 : vector<8x512xf32>
    %15 = vector.extract_strided_slice %14 {offsets = [0, 0], sizes = [8, 128], strides = [1, 1]} : vector<8x512xf32> to vector<8x128xf32>
    %cst_11 = arith.constant 0.000000e+00 : f32
    %16 = vector.broadcast %cst_11 : f32 to vector<8x128xf32>
    %17 = arith.subf %16, %15 : vector<8x128xf32>
    %18 = math.exp %17 : vector<8x128xf32>
    %cst_12 = arith.constant 1.000000e+00 : f32
    %19 = vector.broadcast %cst_12 : f32 to vector<8x128xf32>
    %20 = arith.addf %19, %18 : vector<8x128xf32>
    %21 = tpu.reciprocal %20 {approx = true} : vector<8x128xf32> -> vector<8x128xf32>
    %22 = vector.extract_strided_slice %14 {offsets = [0, 128], sizes = [8, 128], strides = [1, 1]} : vector<8x512xf32> to vector<8x128xf32>
    %cst_13 = arith.constant 0.000000e+00 : f32
    %23 = vector.broadcast %cst_13 : f32 to vector<8x128xf32>
    %24 = arith.subf %23, %22 : vector<8x128xf32>
    %25 = math.exp %24 : vector<8x128xf32>
    %cst_14 = arith.constant 1.000000e+00 : f32
    %26 = vector.broadcast %cst_14 : f32 to vector<8x128xf32>
    %27 = arith.addf %26, %25 : vector<8x128xf32>
    %28 = tpu.reciprocal %27 {approx = true} : vector<8x128xf32> -> vector<8x128xf32>
    %29 = vector.extract_strided_slice %14 {offsets = [0, 256], sizes = [8, 128], strides = [1, 1]} : vector<8x512xf32> to vector<8x128xf32>
    %30 = math.tanh %29 : vector<8x128xf32>
    %31 = vector.extract_strided_slice %14 {offsets = [0, 384], sizes = [8, 128], strides = [1, 1]} : vector<8x512xf32> to vector<8x128xf32>
    %cst_15 = arith.constant 0.000000e+00 : f32
    %32 = vector.broadcast %cst_15 : f32 to vector<8x128xf32>
    %33 = arith.subf %32, %31 : vector<8x128xf32>
    %34 = math.exp %33 : vector<8x128xf32>
    %cst_16 = arith.constant 1.000000e+00 : f32
    %35 = vector.broadcast %cst_16 : f32 to vector<8x128xf32>
    %36 = arith.addf %35, %34 : vector<8x128xf32>
    %37 = tpu.reciprocal %36 {approx = true} : vector<8x128xf32> -> vector<8x128xf32>
    %38 = arith.mulf %28, %7 : vector<8x128xf32>
    %39 = arith.mulf %21, %30 : vector<8x128xf32>
    %40 = arith.addf %38, %39 : vector<8x128xf32>
    %41 = math.tanh %40 : vector<8x128xf32>
    %42 = arith.mulf %37, %41 : vector<8x128xf32>
    %43 = arith.addi %0, %c0_i32_8 : i32
    %44 = vector.broadcast %43 : i32 to vector<8x1xi32>
    %45 = arith.cmpi slt, %44, %5 : vector<8x1xi32>
    %46 = arith.extui %45 : vector<8x1xi1> to vector<8x1xi32>
    %47 = arith.sitofp %46 : vector<8x1xi32> to vector<8x1xf32>
    %48 = vector.broadcast %47 : vector<8x1xf32> to vector<8x128xf32>
    %49 = arith.mulf %42, %48 : vector<8x128xf32>
    %50 = arith.truncf %49 : vector<8x128xf32> to vector<8x128xbf16>
    %51 = arith.index_cast %c0_i32_8 : i32 to index
    %c0_17 = arith.constant 0 : index
    %c0_18 = arith.constant 0 : index
    %52 = vector.load %arg4[%51, %c0_17, %c0_18] : memref<8x8x128xbf16, #tpu.memory_space<vmem>>, vector<1x8x128xbf16>
    %53 = vector.shape_cast %52 : vector<1x8x128xbf16> to vector<8x128xbf16>
    %54 = vector.shape_cast %50 : vector<8x128xbf16> to vector<1x8x128xbf16>
    tpu.vector_store %arg4[%51, %c0_17, %c0_18], %54 {strides = array<i32>} : memref<8x8x128xbf16, #tpu.memory_space<vmem>>, vector<1x8x128xbf16>,
    %c1_i32 = arith.constant 1 : i32
    %55 = arith.index_cast %c1_i32 : i32 to index
    %c0_19 = arith.constant 0 : index
    %c0_20 = arith.constant 0 : index
    %56 = vector.load %arg1[%55, %c0_19, %c0_20] : memref<8x8x512xbf16, #tpu.memory_space<vmem>>, vector<1x8x512xbf16>
    %57 = vector.shape_cast %56 : vector<1x8x512xbf16> to vector<8x512xbf16>
    %58 = arith.extf %57 : vector<8x512xbf16> to vector<8x512xf32>
    %59 = arith.truncf %42 : vector<8x128xf32> to vector<8x128xbf16>
    %cst_21 = arith.constant dense<0.000000e+00> : vector<8x512xf32>
    %60 = tpu.matmul %59, %4, %cst_21 {dimension_numbers = #tpu.dot_dimension_numbers<[1], [0], [0], [1], [0, 0, 1, 1], [], []>} : vector<8x128xbf16>, vector<128x512xbf16>, vector<8x512xf32> -> vector<8x512xf32>
    %61 = arith.addf %58, %60 : vector<8x512xf32>
    %62 = vector.extract_strided_slice %61 {offsets = [0, 0], sizes = [8, 128], strides = [1, 1]} : vector<8x512xf32> to vector<8x128xf32>
    %cst_22 = arith.constant 0.000000e+00 : f32
    %63 = vector.broadcast %cst_22 : f32 to vector<8x128xf32>
    %64 = arith.subf %63, %62 : vector<8x128xf32>
    %65 = math.exp %64 : vector<8x128xf32>
    %cst_23 = arith.constant 1.000000e+00 : f32
    %66 = vector.broadcast %cst_23 : f32 to vector<8x128xf32>
    %67 = arith.addf %66, %65 : vector<8x128xf32>
    %68 = tpu.reciprocal %67 {approx = true} : vector<8x128xf32> -> vector<8x128xf32>
    %69 = vector.extract_strided_slice %61 {offsets = [0, 128], sizes = [8, 128], strides = [1, 1]} : vector<8x512xf32> to vector<8x128xf32>
    %cst_24 = arith.constant 0.000000e+00 : f32
    %70 = vector.broadcast %cst_24 : f32 to vector<8x128xf32>
    %71 = arith.subf %70, %69 : vector<8x128xf32>
    %72 = math.exp %71 : vector<8x128xf32>
    %cst_25 = arith.constant 1.000000e+00 : f32
    %73 = vector.broadcast %cst_25 : f32 to vector<8x128xf32>
    %74 = arith.addf %73, %72 : vector<8x128xf32>
    %75 = tpu.reciprocal %74 {approx = true} : vector<8x128xf32> -> vector<8x128xf32>
    %76 = vector.extract_strided_slice %61 {offsets = [0, 256], sizes = [8, 128], strides = [1, 1]} : vector<8x512xf32> to vector<8x128xf32>
    %77 = math.tanh %76 : vector<8x128xf32>
    %78 = vector.extract_strided_slice %61 {offsets = [0, 384], sizes = [8, 128], strides = [1, 1]} : vector<8x512xf32> to vector<8x128xf32>
    %cst_26 = arith.constant 0.000000e+00 : f32
    %79 = vector.broadcast %cst_26 : f32 to vector<8x128xf32>
    %80 = arith.subf %79, %78 : vector<8x128xf32>
    %81 = math.exp %80 : vector<8x128xf32>
    %cst_27 = arith.constant 1.000000e+00 : f32
    %82 = vector.broadcast %cst_27 : f32 to vector<8x128xf32>
    %83 = arith.addf %82, %81 : vector<8x128xf32>
    %84 = tpu.reciprocal %83 {approx = true} : vector<8x128xf32> -> vector<8x128xf32>
    %85 = arith.mulf %75, %40 : vector<8x128xf32>
    %86 = arith.mulf %68, %77 : vector<8x128xf32>
    %87 = arith.addf %85, %86 : vector<8x128xf32>
    %88 = math.tanh %87 : vector<8x128xf32>
    %89 = arith.mulf %84, %88 : vector<8x128xf32>
    %90 = arith.addi %0, %c1_i32 : i32
    %91 = vector.broadcast %90 : i32 to vector<8x1xi32>
    %92 = arith.cmpi slt, %91, %5 : vector<8x1xi32>
    %93 = arith.extui %92 : vector<8x1xi1> to vector<8x1xi32>
    %94 = arith.sitofp %93 : vector<8x1xi32> to vector<8x1xf32>
    %95 = vector.broadcast %94 : vector<8x1xf32> to vector<8x128xf32>
    %96 = arith.mulf %89, %95 : vector<8x128xf32>
    %97 = arith.truncf %96 : vector<8x128xf32> to vector<8x128xbf16>
    %98 = arith.index_cast %c1_i32 : i32 to index
    %c0_28 = arith.constant 0 : index
    %c0_29 = arith.constant 0 : index
    %99 = vector.load %arg4[%98, %c0_28, %c0_29] : memref<8x8x128xbf16, #tpu.memory_space<vmem>>, vector<1x8x128xbf16>
    %100 = vector.shape_cast %99 : vector<1x8x128xbf16> to vector<8x128xbf16>
    %101 = vector.shape_cast %97 : vector<8x128xbf16> to vector<1x8x128xbf16>
    tpu.vector_store %arg4[%98, %c0_28, %c0_29], %101 {strides = array<i32>} : memref<8x8x128xbf16, #tpu.memory_space<vmem>>, vector<1x8x128xbf16>,
    %c2_i32 = arith.constant 2 : i32
    %102 = arith.index_cast %c2_i32 : i32 to index
    %c0_30 = arith.constant 0 : index
    %c0_31 = arith.constant 0 : index
    %103 = vector.load %arg1[%102, %c0_30, %c0_31] : memref<8x8x512xbf16, #tpu.memory_space<vmem>>, vector<1x8x512xbf16>
    %104 = vector.shape_cast %103 : vector<1x8x512xbf16> to vector<8x512xbf16>
    %105 = arith.extf %104 : vector<8x512xbf16> to vector<8x512xf32>
    %106 = arith.truncf %89 : vector<8x128xf32> to vector<8x128xbf16>
    %cst_32 = arith.constant dense<0.000000e+00> : vector<8x512xf32>
    %107 = tpu.matmul %106, %4, %cst_32 {dimension_numbers = #tpu.dot_dimension_numbers<[1], [0], [0], [1], [0, 0, 1, 1], [], []>} : vector<8x128xbf16>, vector<128x512xbf16>, vector<8x512xf32> -> vector<8x512xf32>
    %108 = arith.addf %105, %107 : vector<8x512xf32>
    %109 = vector.extract_strided_slice %108 {offsets = [0, 0], sizes = [8, 128], strides = [1, 1]} : vector<8x512xf32> to vector<8x128xf32>
    %cst_33 = arith.constant 0.000000e+00 : f32
    %110 = vector.broadcast %cst_33 : f32 to vector<8x128xf32>
    %111 = arith.subf %110, %109 : vector<8x128xf32>
    %112 = math.exp %111 : vector<8x128xf32>
    %cst_34 = arith.constant 1.000000e+00 : f32
    %113 = vector.broadcast %cst_34 : f32 to vector<8x128xf32>
    %114 = arith.addf %113, %112 : vector<8x128xf32>
    %115 = tpu.reciprocal %114 {approx = true} : vector<8x128xf32> -> vector<8x128xf32>
    %116 = vector.extract_strided_slice %108 {offsets = [0, 128], sizes = [8, 128], strides = [1, 1]} : vector<8x512xf32> to vector<8x128xf32>
    %cst_35 = arith.constant 0.000000e+00 : f32
    %117 = vector.broadcast %cst_35 : f32 to vector<8x128xf32>
    %118 = arith.subf %117, %116 : vector<8x128xf32>
    %119 = math.exp %118 : vector<8x128xf32>
    %cst_36 = arith.constant 1.000000e+00 : f32
    %120 = vector.broadcast %cst_36 : f32 to vector<8x128xf32>
    %121 = arith.addf %120, %119 : vector<8x128xf32>
    %122 = tpu.reciprocal %121 {approx = true} : vector<8x128xf32> -> vector<8x128xf32>
    %123 = vector.extract_strided_slice %108 {offsets = [0, 256], sizes = [8, 128], strides = [1, 1]} : vector<8x512xf32> to vector<8x128xf32>
    %124 = math.tanh %123 : vector<8x128xf32>
    %125 = vector.extract_strided_slice %108 {offsets = [0, 384], sizes = [8, 128], strides = [1, 1]} : vector<8x512xf32> to vector<8x128xf32>
    %cst_37 = arith.constant 0.000000e+00 : f32
    %126 = vector.broadcast %cst_37 : f32 to vector<8x128xf32>
    %127 = arith.subf %126, %125 : vector<8x128xf32>
    %128 = math.exp %127 : vector<8x128xf32>
    %cst_38 = arith.constant 1.000000e+00 : f32
    %129 = vector.broadcast %cst_38 : f32 to vector<8x128xf32>
    %130 = arith.addf %129, %128 : vector<8x128xf32>
    %131 = tpu.reciprocal %130 {approx = true} : vector<8x128xf32> -> vector<8x128xf32>
    %132 = arith.mulf %122, %87 : vector<8x128xf32>
    %133 = arith.mulf %115, %124 : vector<8x128xf32>
    %134 = arith.addf %132, %133 : vector<8x128xf32>
    %135 = math.tanh %134 : vector<8x128xf32>
    %136 = arith.mulf %131, %135 : vector<8x128xf32>
    %137 = arith.addi %0, %c2_i32 : i32
    %138 = vector.broadcast %137 : i32 to vector<8x1xi32>
    %139 = arith.cmpi slt, %138, %5 : vector<8x1xi32>
    %140 = arith.extui %139 : vector<8x1xi1> to vector<8x1xi32>
    %141 = arith.sitofp %140 : vector<8x1xi32> to vector<8x1xf32>
    %142 = vector.broadcast %141 : vector<8x1xf32> to vector<8x128xf32>
    %143 = arith.mulf %136, %142 : vector<8x128xf32>
    %144 = arith.truncf %143 : vector<8x128xf32> to vector<8x128xbf16>
    %145 = arith.index_cast %c2_i32 : i32 to index
    %c0_39 = arith.constant 0 : index
    %c0_40 = arith.constant 0 : index
    %146 = vector.load %arg4[%145, %c0_39, %c0_40] : memref<8x8x128xbf16, #tpu.memory_space<vmem>>, vector<1x8x128xbf16>
    %147 = vector.shape_cast %146 : vector<1x8x128xbf16> to vector<8x128xbf16>
    %148 = vector.shape_cast %144 : vector<8x128xbf16> to vector<1x8x128xbf16>
    tpu.vector_store %arg4[%145, %c0_39, %c0_40], %148 {strides = array<i32>} : memref<8x8x128xbf16, #tpu.memory_space<vmem>>, vector<1x8x128xbf16>,
    %c3_i32 = arith.constant 3 : i32
    %149 = arith.index_cast %c3_i32 : i32 to index
    %c0_41 = arith.constant 0 : index
    %c0_42 = arith.constant 0 : index
    %150 = vector.load %arg1[%149, %c0_41, %c0_42] : memref<8x8x512xbf16, #tpu.memory_space<vmem>>, vector<1x8x512xbf16>
    %151 = vector.shape_cast %150 : vector<1x8x512xbf16> to vector<8x512xbf16>
    %152 = arith.extf %151 : vector<8x512xbf16> to vector<8x512xf32>
    %153 = arith.truncf %136 : vector<8x128xf32> to vector<8x128xbf16>
    %cst_43 = arith.constant dense<0.000000e+00> : vector<8x512xf32>
    %154 = tpu.matmul %153, %4, %cst_43 {dimension_numbers = #tpu.dot_dimension_numbers<[1], [0], [0], [1], [0, 0, 1, 1], [], []>} : vector<8x128xbf16>, vector<128x512xbf16>, vector<8x512xf32> -> vector<8x512xf32>
    %155 = arith.addf %152, %154 : vector<8x512xf32>
    %156 = vector.extract_strided_slice %155 {offsets = [0, 0], sizes = [8, 128], strides = [1, 1]} : vector<8x512xf32> to vector<8x128xf32>
    %cst_44 = arith.constant 0.000000e+00 : f32
    %157 = vector.broadcast %cst_44 : f32 to vector<8x128xf32>
    %158 = arith.subf %157, %156 : vector<8x128xf32>
    %159 = math.exp %158 : vector<8x128xf32>
    %cst_45 = arith.constant 1.000000e+00 : f32
    %160 = vector.broadcast %cst_45 : f32 to vector<8x128xf32>
    %161 = arith.addf %160, %159 : vector<8x128xf32>
    %162 = tpu.reciprocal %161 {approx = true} : vector<8x128xf32> -> vector<8x128xf32>
    %163 = vector.extract_strided_slice %155 {offsets = [0, 128], sizes = [8, 128], strides = [1, 1]} : vector<8x512xf32> to vector<8x128xf32>
    %cst_46 = arith.constant 0.000000e+00 : f32
    %164 = vector.broadcast %cst_46 : f32 to vector<8x128xf32>
    %165 = arith.subf %164, %163 : vector<8x128xf32>
    %166 = math.exp %165 : vector<8x128xf32>
    %cst_47 = arith.constant 1.000000e+00 : f32
    %167 = vector.broadcast %cst_47 : f32 to vector<8x128xf32>
    %168 = arith.addf %167, %166 : vector<8x128xf32>
    %169 = tpu.reciprocal %168 {approx = true} : vector<8x128xf32> -> vector<8x128xf32>
    %170 = vector.extract_strided_slice %155 {offsets = [0, 256], sizes = [8, 128], strides = [1, 1]} : vector<8x512xf32> to vector<8x128xf32>
    %171 = math.tanh %170 : vector<8x128xf32>
    %172 = vector.extract_strided_slice %155 {offsets = [0, 384], sizes = [8, 128], strides = [1, 1]} : vector<8x512xf32> to vector<8x128xf32>
    %cst_48 = arith.constant 0.000000e+00 : f32
    %173 = vector.broadcast %cst_48 : f32 to vector<8x128xf32>
    %174 = arith.subf %173, %172 : vector<8x128xf32>
    %175 = math.exp %174 : vector<8x128xf32>
    %cst_49 = arith.constant 1.000000e+00 : f32
    %176 = vector.broadcast %cst_49 : f32 to vector<8x128xf32>
    %177 = arith.addf %176, %175 : vector<8x128xf32>
    %178 = tpu.reciprocal %177 {approx = true} : vector<8x128xf32> -> vector<8x128xf32>
    %179 = arith.mulf %169, %134 : vector<8x128xf32>
    %180 = arith.mulf %162, %171 : vector<8x128xf32>
    %181 = arith.addf %179, %180 : vector<8x128xf32>
    %182 = math.tanh %181 : vector<8x128xf32>
    %183 = arith.mulf %178, %182 : vector<8x128xf32>
    %184 = arith.addi %0, %c3_i32 : i32
    %185 = vector.broadcast %184 : i32 to vector<8x1xi32>
    %186 = arith.cmpi slt, %185, %5 : vector<8x1xi32>
    %187 = arith.extui %186 : vector<8x1xi1> to vector<8x1xi32>
    %188 = arith.sitofp %187 : vector<8x1xi32> to vector<8x1xf32>
    %189 = vector.broadcast %188 : vector<8x1xf32> to vector<8x128xf32>
    %190 = arith.mulf %183, %189 : vector<8x128xf32>
    %191 = arith.truncf %190 : vector<8x128xf32> to vector<8x128xbf16>
    %192 = arith.index_cast %c3_i32 : i32 to index
    %c0_50 = arith.constant 0 : index
    %c0_51 = arith.constant 0 : index
    %193 = vector.load %arg4[%192, %c0_50, %c0_51] : memref<8x8x128xbf16, #tpu.memory_space<vmem>>, vector<1x8x128xbf16>
    %194 = vector.shape_cast %193 : vector<1x8x128xbf16> to vector<8x128xbf16>
    %195 = vector.shape_cast %191 : vector<8x128xbf16> to vector<1x8x128xbf16>
    tpu.vector_store %arg4[%192, %c0_50, %c0_51], %195 {strides = array<i32>} : memref<8x8x128xbf16, #tpu.memory_space<vmem>>, vector<1x8x128xbf16>,
    %c4_i32 = arith.constant 4 : i32
    %196 = arith.index_cast %c4_i32 : i32 to index
    %c0_52 = arith.constant 0 : index
    %c0_53 = arith.constant 0 : index
    %197 = vector.load %arg1[%196, %c0_52, %c0_53] : memref<8x8x512xbf16, #tpu.memory_space<vmem>>, vector<1x8x512xbf16>
    %198 = vector.shape_cast %197 : vector<1x8x512xbf16> to vector<8x512xbf16>
    %199 = arith.extf %198 : vector<8x512xbf16> to vector<8x512xf32>
    %200 = arith.truncf %183 : vector<8x128xf32> to vector<8x128xbf16>
    %cst_54 = arith.constant dense<0.000000e+00> : vector<8x512xf32>
    %201 = tpu.matmul %200, %4, %cst_54 {dimension_numbers = #tpu.dot_dimension_numbers<[1], [0], [0], [1], [0, 0, 1, 1], [], []>} : vector<8x128xbf16>, vector<128x512xbf16>, vector<8x512xf32> -> vector<8x512xf32>
    %202 = arith.addf %199, %201 : vector<8x512xf32>
    %203 = vector.extract_strided_slice %202 {offsets = [0, 0], sizes = [8, 128], strides = [1, 1]} : vector<8x512xf32> to vector<8x128xf32>
    %cst_55 = arith.constant 0.000000e+00 : f32
    %204 = vector.broadcast %cst_55 : f32 to vector<8x128xf32>
    %205 = arith.subf %204, %203 : vector<8x128xf32>
    %206 = math.exp %205 : vector<8x128xf32>
    %cst_56 = arith.constant 1.000000e+00 : f32
    %207 = vector.broadcast %cst_56 : f32 to vector<8x128xf32>
    %208 = arith.addf %207, %206 : vector<8x128xf32>
    %209 = tpu.reciprocal %208 {approx = true} : vector<8x128xf32> -> vector<8x128xf32>
    %210 = vector.extract_strided_slice %202 {offsets = [0, 128], sizes = [8, 128], strides = [1, 1]} : vector<8x512xf32> to vector<8x128xf32>
    %cst_57 = arith.constant 0.000000e+00 : f32
    %211 = vector.broadcast %cst_57 : f32 to vector<8x128xf32>
    %212 = arith.subf %211, %210 : vector<8x128xf32>
    %213 = math.exp %212 : vector<8x128xf32>
    %cst_58 = arith.constant 1.000000e+00 : f32
    %214 = vector.broadcast %cst_58 : f32 to vector<8x128xf32>
    %215 = arith.addf %214, %213 : vector<8x128xf32>
    %216 = tpu.reciprocal %215 {approx = true} : vector<8x128xf32> -> vector<8x128xf32>
    %217 = vector.extract_strided_slice %202 {offsets = [0, 256], sizes = [8, 128], strides = [1, 1]} : vector<8x512xf32> to vector<8x128xf32>
    %218 = math.tanh %217 : vector<8x128xf32>
    %219 = vector.extract_strided_slice %202 {offsets = [0, 384], sizes = [8, 128], strides = [1, 1]} : vector<8x512xf32> to vector<8x128xf32>
    %cst_59 = arith.constant 0.000000e+00 : f32
    %220 = vector.broadcast %cst_59 : f32 to vector<8x128xf32>
    %221 = arith.subf %220, %219 : vector<8x128xf32>
    %222 = math.exp %221 : vector<8x128xf32>
    %cst_60 = arith.constant 1.000000e+00 : f32
    %223 = vector.broadcast %cst_60 : f32 to vector<8x128xf32>
    %224 = arith.addf %223, %222 : vector<8x128xf32>
    %225 = tpu.reciprocal %224 {approx = true} : vector<8x128xf32> -> vector<8x128xf32>
    %226 = arith.mulf %216, %181 : vector<8x128xf32>
    %227 = arith.mulf %209, %218 : vector<8x128xf32>
    %228 = arith.addf %226, %227 : vector<8x128xf32>
    %229 = math.tanh %228 : vector<8x128xf32>
    %230 = arith.mulf %225, %229 : vector<8x128xf32>
    %231 = arith.addi %0, %c4_i32 : i32
    %232 = vector.broadcast %231 : i32 to vector<8x1xi32>
    %233 = arith.cmpi slt, %232, %5 : vector<8x1xi32>
    %234 = arith.extui %233 : vector<8x1xi1> to vector<8x1xi32>
    %235 = arith.sitofp %234 : vector<8x1xi32> to vector<8x1xf32>
    %236 = vector.broadcast %235 : vector<8x1xf32> to vector<8x128xf32>
    %237 = arith.mulf %230, %236 : vector<8x128xf32>
    %238 = arith.truncf %237 : vector<8x128xf32> to vector<8x128xbf16>
    %239 = arith.index_cast %c4_i32 : i32 to index
    %c0_61 = arith.constant 0 : index
    %c0_62 = arith.constant 0 : index
    %240 = vector.load %arg4[%239, %c0_61, %c0_62] : memref<8x8x128xbf16, #tpu.memory_space<vmem>>, vector<1x8x128xbf16>
    %241 = vector.shape_cast %240 : vector<1x8x128xbf16> to vector<8x128xbf16>
    %242 = vector.shape_cast %238 : vector<8x128xbf16> to vector<1x8x128xbf16>
    tpu.vector_store %arg4[%239, %c0_61, %c0_62], %242 {strides = array<i32>} : memref<8x8x128xbf16, #tpu.memory_space<vmem>>, vector<1x8x128xbf16>,
    %c5_i32 = arith.constant 5 : i32
    %243 = arith.index_cast %c5_i32 : i32 to index
    %c0_63 = arith.constant 0 : index
    %c0_64 = arith.constant 0 : index
    %244 = vector.load %arg1[%243, %c0_63, %c0_64] : memref<8x8x512xbf16, #tpu.memory_space<vmem>>, vector<1x8x512xbf16>
    %245 = vector.shape_cast %244 : vector<1x8x512xbf16> to vector<8x512xbf16>
    %246 = arith.extf %245 : vector<8x512xbf16> to vector<8x512xf32>
    %247 = arith.truncf %230 : vector<8x128xf32> to vector<8x128xbf16>
    %cst_65 = arith.constant dense<0.000000e+00> : vector<8x512xf32>
    %248 = tpu.matmul %247, %4, %cst_65 {dimension_numbers = #tpu.dot_dimension_numbers<[1], [0], [0], [1], [0, 0, 1, 1], [], []>} : vector<8x128xbf16>, vector<128x512xbf16>, vector<8x512xf32> -> vector<8x512xf32>
    %249 = arith.addf %246, %248 : vector<8x512xf32>
    %250 = vector.extract_strided_slice %249 {offsets = [0, 0], sizes = [8, 128], strides = [1, 1]} : vector<8x512xf32> to vector<8x128xf32>
    %cst_66 = arith.constant 0.000000e+00 : f32
    %251 = vector.broadcast %cst_66 : f32 to vector<8x128xf32>
    %252 = arith.subf %251, %250 : vector<8x128xf32>
    %253 = math.exp %252 : vector<8x128xf32>
    %cst_67 = arith.constant 1.000000e+00 : f32
    %254 = vector.broadcast %cst_67 : f32 to vector<8x128xf32>
    %255 = arith.addf %254, %253 : vector<8x128xf32>
    %256 = tpu.reciprocal %255 {approx = true} : vector<8x128xf32> -> vector<8x128xf32>
    %257 = vector.extract_strided_slice %249 {offsets = [0, 128], sizes = [8, 128], strides = [1, 1]} : vector<8x512xf32> to vector<8x128xf32>
    %cst_68 = arith.constant 0.000000e+00 : f32
    %258 = vector.broadcast %cst_68 : f32 to vector<8x128xf32>
    %259 = arith.subf %258, %257 : vector<8x128xf32>
    %260 = math.exp %259 : vector<8x128xf32>
    %cst_69 = arith.constant 1.000000e+00 : f32
    %261 = vector.broadcast %cst_69 : f32 to vector<8x128xf32>
    %262 = arith.addf %261, %260 : vector<8x128xf32>
    %263 = tpu.reciprocal %262 {approx = true} : vector<8x128xf32> -> vector<8x128xf32>
    %264 = vector.extract_strided_slice %249 {offsets = [0, 256], sizes = [8, 128], strides = [1, 1]} : vector<8x512xf32> to vector<8x128xf32>
    %265 = math.tanh %264 : vector<8x128xf32>
    %266 = vector.extract_strided_slice %249 {offsets = [0, 384], sizes = [8, 128], strides = [1, 1]} : vector<8x512xf32> to vector<8x128xf32>
    %cst_70 = arith.constant 0.000000e+00 : f32
    %267 = vector.broadcast %cst_70 : f32 to vector<8x128xf32>
    %268 = arith.subf %267, %266 : vector<8x128xf32>
    %269 = math.exp %268 : vector<8x128xf32>
    %cst_71 = arith.constant 1.000000e+00 : f32
    %270 = vector.broadcast %cst_71 : f32 to vector<8x128xf32>
    %271 = arith.addf %270, %269 : vector<8x128xf32>
    %272 = tpu.reciprocal %271 {approx = true} : vector<8x128xf32> -> vector<8x128xf32>
    %273 = arith.mulf %263, %228 : vector<8x128xf32>
    %274 = arith.mulf %256, %265 : vector<8x128xf32>
    %275 = arith.addf %273, %274 : vector<8x128xf32>
    %276 = math.tanh %275 : vector<8x128xf32>
    %277 = arith.mulf %272, %276 : vector<8x128xf32>
    %278 = arith.addi %0, %c5_i32 : i32
    %279 = vector.broadcast %278 : i32 to vector<8x1xi32>
    %280 = arith.cmpi slt, %279, %5 : vector<8x1xi32>
    %281 = arith.extui %280 : vector<8x1xi1> to vector<8x1xi32>
    %282 = arith.sitofp %281 : vector<8x1xi32> to vector<8x1xf32>
    %283 = vector.broadcast %282 : vector<8x1xf32> to vector<8x128xf32>
    %284 = arith.mulf %277, %283 : vector<8x128xf32>
    %285 = arith.truncf %284 : vector<8x128xf32> to vector<8x128xbf16>
    %286 = arith.index_cast %c5_i32 : i32 to index
    %c0_72 = arith.constant 0 : index
    %c0_73 = arith.constant 0 : index
    %287 = vector.load %arg4[%286, %c0_72, %c0_73] : memref<8x8x128xbf16, #tpu.memory_space<vmem>>, vector<1x8x128xbf16>
    %288 = vector.shape_cast %287 : vector<1x8x128xbf16> to vector<8x128xbf16>
    %289 = vector.shape_cast %285 : vector<8x128xbf16> to vector<1x8x128xbf16>
    tpu.vector_store %arg4[%286, %c0_72, %c0_73], %289 {strides = array<i32>} : memref<8x8x128xbf16, #tpu.memory_space<vmem>>, vector<1x8x128xbf16>,
    %c6_i32 = arith.constant 6 : i32
    %290 = arith.index_cast %c6_i32 : i32 to index
    %c0_74 = arith.constant 0 : index
    %c0_75 = arith.constant 0 : index
    %291 = vector.load %arg1[%290, %c0_74, %c0_75] : memref<8x8x512xbf16, #tpu.memory_space<vmem>>, vector<1x8x512xbf16>
    %292 = vector.shape_cast %291 : vector<1x8x512xbf16> to vector<8x512xbf16>
    %293 = arith.extf %292 : vector<8x512xbf16> to vector<8x512xf32>
    %294 = arith.truncf %277 : vector<8x128xf32> to vector<8x128xbf16>
    %cst_76 = arith.constant dense<0.000000e+00> : vector<8x512xf32>
    %295 = tpu.matmul %294, %4, %cst_76 {dimension_numbers = #tpu.dot_dimension_numbers<[1], [0], [0], [1], [0, 0, 1, 1], [], []>} : vector<8x128xbf16>, vector<128x512xbf16>, vector<8x512xf32> -> vector<8x512xf32>
    %296 = arith.addf %293, %295 : vector<8x512xf32>
    %297 = vector.extract_strided_slice %296 {offsets = [0, 0], sizes = [8, 128], strides = [1, 1]} : vector<8x512xf32> to vector<8x128xf32>
    %cst_77 = arith.constant 0.000000e+00 : f32
    %298 = vector.broadcast %cst_77 : f32 to vector<8x128xf32>
    %299 = arith.subf %298, %297 : vector<8x128xf32>
    %300 = math.exp %299 : vector<8x128xf32>
    %cst_78 = arith.constant 1.000000e+00 : f32
    %301 = vector.broadcast %cst_78 : f32 to vector<8x128xf32>
    %302 = arith.addf %301, %300 : vector<8x128xf32>
    %303 = tpu.reciprocal %302 {approx = true} : vector<8x128xf32> -> vector<8x128xf32>
    %304 = vector.extract_strided_slice %296 {offsets = [0, 128], sizes = [8, 128], strides = [1, 1]} : vector<8x512xf32> to vector<8x128xf32>
    %cst_79 = arith.constant 0.000000e+00 : f32
    %305 = vector.broadcast %cst_79 : f32 to vector<8x128xf32>
    %306 = arith.subf %305, %304 : vector<8x128xf32>
    %307 = math.exp %306 : vector<8x128xf32>
    %cst_80 = arith.constant 1.000000e+00 : f32
    %308 = vector.broadcast %cst_80 : f32 to vector<8x128xf32>
    %309 = arith.addf %308, %307 : vector<8x128xf32>
    %310 = tpu.reciprocal %309 {approx = true} : vector<8x128xf32> -> vector<8x128xf32>
    %311 = vector.extract_strided_slice %296 {offsets = [0, 256], sizes = [8, 128], strides = [1, 1]} : vector<8x512xf32> to vector<8x128xf32>
    %312 = math.tanh %311 : vector<8x128xf32>
    %313 = vector.extract_strided_slice %296 {offsets = [0, 384], sizes = [8, 128], strides = [1, 1]} : vector<8x512xf32> to vector<8x128xf32>
    %cst_81 = arith.constant 0.000000e+00 : f32
    %314 = vector.broadcast %cst_81 : f32 to vector<8x128xf32>
    %315 = arith.subf %314, %313 : vector<8x128xf32>
    %316 = math.exp %315 : vector<8x128xf32>
    %cst_82 = arith.constant 1.000000e+00 : f32
    %317 = vector.broadcast %cst_82 : f32 to vector<8x128xf32>
    %318 = arith.addf %317, %316 : vector<8x128xf32>
    %319 = tpu.reciprocal %318 {approx = true} : vector<8x128xf32> -> vector<8x128xf32>
    %320 = arith.mulf %310, %275 : vector<8x128xf32>
    %321 = arith.mulf %303, %312 : vector<8x128xf32>
    %322 = arith.addf %320, %321 : vector<8x128xf32>
    %323 = math.tanh %322 : vector<8x128xf32>
    %324 = arith.mulf %319, %323 : vector<8x128xf32>
    %325 = arith.addi %0, %c6_i32 : i32
    %326 = vector.broadcast %325 : i32 to vector<8x1xi32>
    %327 = arith.cmpi slt, %326, %5 : vector<8x1xi32>
    %328 = arith.extui %327 : vector<8x1xi1> to vector<8x1xi32>
    %329 = arith.sitofp %328 : vector<8x1xi32> to vector<8x1xf32>
    %330 = vector.broadcast %329 : vector<8x1xf32> to vector<8x128xf32>
    %331 = arith.mulf %324, %330 : vector<8x128xf32>
    %332 = arith.truncf %331 : vector<8x128xf32> to vector<8x128xbf16>
    %333 = arith.index_cast %c6_i32 : i32 to index
    %c0_83 = arith.constant 0 : index
    %c0_84 = arith.constant 0 : index
    %334 = vector.load %arg4[%333, %c0_83, %c0_84] : memref<8x8x128xbf16, #tpu.memory_space<vmem>>, vector<1x8x128xbf16>
    %335 = vector.shape_cast %334 : vector<1x8x128xbf16> to vector<8x128xbf16>
    %336 = vector.shape_cast %332 : vector<8x128xbf16> to vector<1x8x128xbf16>
    tpu.vector_store %arg4[%333, %c0_83, %c0_84], %336 {strides = array<i32>} : memref<8x8x128xbf16, #tpu.memory_space<vmem>>, vector<1x8x128xbf16>,
    %c7_i32 = arith.constant 7 : i32
    %337 = arith.index_cast %c7_i32 : i32 to index
    %c0_85 = arith.constant 0 : index
    %c0_86 = arith.constant 0 : index
    %338 = vector.load %arg1[%337, %c0_85, %c0_86] : memref<8x8x512xbf16, #tpu.memory_space<vmem>>, vector<1x8x512xbf16>
    %339 = vector.shape_cast %338 : vector<1x8x512xbf16> to vector<8x512xbf16>
    %340 = arith.extf %339 : vector<8x512xbf16> to vector<8x512xf32>
    %341 = arith.truncf %324 : vector<8x128xf32> to vector<8x128xbf16>
    %cst_87 = arith.constant dense<0.000000e+00> : vector<8x512xf32>
    %342 = tpu.matmul %341, %4, %cst_87 {dimension_numbers = #tpu.dot_dimension_numbers<[1], [0], [0], [1], [0, 0, 1, 1], [], []>} : vector<8x128xbf16>, vector<128x512xbf16>, vector<8x512xf32> -> vector<8x512xf32>
    %343 = arith.addf %340, %342 : vector<8x512xf32>
    %344 = vector.extract_strided_slice %343 {offsets = [0, 0], sizes = [8, 128], strides = [1, 1]} : vector<8x512xf32> to vector<8x128xf32>
    %cst_88 = arith.constant 0.000000e+00 : f32
    %345 = vector.broadcast %cst_88 : f32 to vector<8x128xf32>
    %346 = arith.subf %345, %344 : vector<8x128xf32>
    %347 = math.exp %346 : vector<8x128xf32>
    %cst_89 = arith.constant 1.000000e+00 : f32
    %348 = vector.broadcast %cst_89 : f32 to vector<8x128xf32>
    %349 = arith.addf %348, %347 : vector<8x128xf32>
    %350 = tpu.reciprocal %349 {approx = true} : vector<8x128xf32> -> vector<8x128xf32>
    %351 = vector.extract_strided_slice %343 {offsets = [0, 128], sizes = [8, 128], strides = [1, 1]} : vector<8x512xf32> to vector<8x128xf32>
    %cst_90 = arith.constant 0.000000e+00 : f32
    %352 = vector.broadcast %cst_90 : f32 to vector<8x128xf32>
    %353 = arith.subf %352, %351 : vector<8x128xf32>
    %354 = math.exp %353 : vector<8x128xf32>
    %cst_91 = arith.constant 1.000000e+00 : f32
    %355 = vector.broadcast %cst_91 : f32 to vector<8x128xf32>
    %356 = arith.addf %355, %354 : vector<8x128xf32>
    %357 = tpu.reciprocal %356 {approx = true} : vector<8x128xf32> -> vector<8x128xf32>
    %358 = vector.extract_strided_slice %343 {offsets = [0, 256], sizes = [8, 128], strides = [1, 1]} : vector<8x512xf32> to vector<8x128xf32>
    %359 = math.tanh %358 : vector<8x128xf32>
    %360 = vector.extract_strided_slice %343 {offsets = [0, 384], sizes = [8, 128], strides = [1, 1]} : vector<8x512xf32> to vector<8x128xf32>
    %cst_92 = arith.constant 0.000000e+00 : f32
    %361 = vector.broadcast %cst_92 : f32 to vector<8x128xf32>
    %362 = arith.subf %361, %360 : vector<8x128xf32>
    %363 = math.exp %362 : vector<8x128xf32>
    %cst_93 = arith.constant 1.000000e+00 : f32
    %364 = vector.broadcast %cst_93 : f32 to vector<8x128xf32>
    %365 = arith.addf %364, %363 : vector<8x128xf32>
    %366 = tpu.reciprocal %365 {approx = true} : vector<8x128xf32> -> vector<8x128xf32>
    %367 = arith.mulf %357, %322 : vector<8x128xf32>
    %368 = arith.mulf %350, %359 : vector<8x128xf32>
    %369 = arith.addf %367, %368 : vector<8x128xf32>
    %370 = math.tanh %369 : vector<8x128xf32>
    %371 = arith.mulf %366, %370 : vector<8x128xf32>
    %372 = arith.addi %0, %c7_i32 : i32
    %373 = vector.broadcast %372 : i32 to vector<8x1xi32>
    %374 = arith.cmpi slt, %373, %5 : vector<8x1xi32>
    %375 = arith.extui %374 : vector<8x1xi1> to vector<8x1xi32>
    %376 = arith.sitofp %375 : vector<8x1xi32> to vector<8x1xf32>
    %377 = vector.broadcast %376 : vector<8x1xf32> to vector<8x128xf32>
    %378 = arith.mulf %371, %377 : vector<8x128xf32>
    %379 = arith.truncf %378 : vector<8x128xf32> to vector<8x128xbf16>
    %380 = arith.index_cast %c7_i32 : i32 to index
    %c0_94 = arith.constant 0 : index
    %c0_95 = arith.constant 0 : index
    %381 = vector.load %arg4[%380, %c0_94, %c0_95] : memref<8x8x128xbf16, #tpu.memory_space<vmem>>, vector<1x8x128xbf16>
    %382 = vector.shape_cast %381 : vector<1x8x128xbf16> to vector<8x128xbf16>
    %383 = vector.shape_cast %379 : vector<8x128xbf16> to vector<1x8x128xbf16>
    tpu.vector_store %arg4[%380, %c0_94, %c0_95], %383 {strides = array<i32>} : memref<8x8x128xbf16, #tpu.memory_space<vmem>>, vector<1x8x128xbf16>,
    %c8_i32_96 = arith.constant 8 : i32
    %c0_97 = arith.constant 0 : index
    %c0_98 = arith.constant 0 : index
    %384 = vector.load %arg5[%c0_97, %c0_98] : memref<8x128xf32, #tpu.memory_space<vmem>>, vector<8x128xf32>
    tpu.vector_store %arg5[%c0_97, %c0_98], %371 {strides = array<i32>} : memref<8x128xf32, #tpu.memory_space<vmem>>, vector<8x128xf32>,
    %c0_99 = arith.constant 0 : index
    %c0_100 = arith.constant 0 : index
    %385 = vector.load %arg6[%c0_99, %c0_100] : memref<8x128xf32, #tpu.memory_space<vmem>>, vector<8x128xf32>
    tpu.vector_store %arg6[%c0_99, %c0_100], %369 {strides = array<i32>} : memref<8x128xf32, #tpu.memory_space<vmem>>, vector<8x128xf32>,
    return
  }
  func.func @transform_0(%arg0: i32) -> (i32, i32, i32) {
    %c0_i32 = arith.constant 0 : i32
    %c0_i32_0 = arith.constant 0 : i32
    %c0_i32_1 = arith.constant 0 : i32
    return %arg0, %c0_i32, %c0_i32_0 : i32, i32, i32
  }
  func.func @transform_1(%arg0: i32) -> (i32, i32) {
    %c0_i32 = arith.constant 0 : i32
    %c0_i32_0 = arith.constant 0 : i32
    %c0_i32_1 = arith.constant 0 : i32
    return %c0_i32, %c0_i32_0 : i32, i32
  }
  func.func @transform_2(%arg0: i32) -> (i32, i32) {
    %c0_i32 = arith.constant 0 : i32
    %c0_i32_0 = arith.constant 0 : i32
    %c0_i32_1 = arith.constant 0 : i32
    return %c0_i32, %c0_i32_0 : i32, i32
  }
  func.func @transform_3(%arg0: i32) -> (i32, i32, i32) {
    %c0_i32 = arith.constant 0 : i32
    %c0_i32_0 = arith.constant 0 : i32
    %c0_i32_1 = arith.constant 0 : i32
    return %arg0, %c0_i32, %c0_i32_0 : i32, i32, i32
  }
}

module attributes {stable_mosaic.version = 11 : i64} {
  func.func @_proj_kernel(%arg0: i32, %arg1: memref<64x128xbf16, #tpu.memory_space<vmem>>, %arg2: memref<128x128xbf16, #tpu.memory_space<vmem>>, %arg3: memref<1x128xf32, #tpu.memory_space<vmem>>, %arg4: memref<64x128xf32, #tpu.memory_space<vmem>>) attributes {dimension_semantics = [#tpu.dimension_semantics<parallel>], iteration_bounds = array<i64: 1>, scalar_prefetch = 0 : i64, scratch_operands = 0 : i64, tpu.core_type = #tpu.core_type<tc>, window_params = [{transform_indices = @transform_0, window_bounds = array<i64: 64, 128>}, {pipeline_mode = #tpu.pipeline_mode<synchronous>, transform_indices = @transform_1, window_bounds = array<i64: 128, 128>}, {pipeline_mode = #tpu.pipeline_mode<synchronous>, transform_indices = @transform_2, window_bounds = array<i64: 1, 128>}, {transform_indices = @transform_3, window_bounds = array<i64: 64, 128>}]} {
    %c0 = arith.constant 0 : index
    %c0_0 = arith.constant 0 : index
    %0 = vector.load %arg1[%c0, %c0_0] : memref<64x128xbf16, #tpu.memory_space<vmem>>, vector<64x128xbf16>
    %c0_1 = arith.constant 0 : index
    %c0_2 = arith.constant 0 : index
    %1 = vector.load %arg2[%c0_1, %c0_2] : memref<128x128xbf16, #tpu.memory_space<vmem>>, vector<128x128xbf16>
    %cst = arith.constant dense<0.000000e+00> : vector<64x128xf32>
    %2 = tpu.matmul %0, %1, %cst {dimension_numbers = #tpu.dot_dimension_numbers<[1], [0], [0], [1], [0, 0, 1, 1], [], []>} : vector<64x128xbf16>, vector<128x128xbf16>, vector<64x128xf32> -> vector<64x128xf32>
    %c0_3 = arith.constant 0 : index
    %c0_4 = arith.constant 0 : index
    %3 = vector.load %arg3[%c0_3, %c0_4] : memref<1x128xf32, #tpu.memory_space<vmem>>, vector<1x128xf32>
    %4 = vector.broadcast %3 : vector<1x128xf32> to vector<64x128xf32>
    %5 = arith.addf %2, %4 : vector<64x128xf32>
    %c0_5 = arith.constant 0 : index
    %c0_6 = arith.constant 0 : index
    %6 = vector.load %arg4[%c0_5, %c0_6] : memref<64x128xf32, #tpu.memory_space<vmem>>, vector<64x128xf32>
    tpu.vector_store %arg4[%c0_5, %c0_6], %5 {strides = array<i32>} : memref<64x128xf32, #tpu.memory_space<vmem>>, vector<64x128xf32>,
    return
  }
  func.func @transform_0(%arg0: i32) -> (i32, i32) {
    %c0_i32 = arith.constant 0 : i32
    %c0_i32_0 = arith.constant 0 : i32
    return %arg0, %c0_i32 : i32, i32
  }
  func.func @transform_1(%arg0: i32) -> (i32, i32) {
    %c0_i32 = arith.constant 0 : i32
    %c0_i32_0 = arith.constant 0 : i32
    %c0_i32_1 = arith.constant 0 : i32
    return %c0_i32, %c0_i32_0 : i32, i32
  }
  func.func @transform_2(%arg0: i32) -> (i32, i32) {
    %c0_i32 = arith.constant 0 : i32
    %c0_i32_0 = arith.constant 0 : i32
    %c0_i32_1 = arith.constant 0 : i32
    return %c0_i32, %c0_i32_0 : i32, i32
  }
  func.func @transform_3(%arg0: i32) -> (i32, i32) {
    %c0_i32 = arith.constant 0 : i32
    %c0_i32_0 = arith.constant 0 : i32
    return %arg0, %c0_i32 : i32, i32
  }
}

</mosaic_0001>

<llo_original>
// kernel: elmo_lstm_encoder.3
$region0: #{elmo_lstm_encoder.3}
  #allocation0 [shape = 'u32[]', space=smem, size = 0x4, offset = 0x4, fixed_abs, tag = 'smem constant byte address 0x4 - core index']
  #allocation1 [shape = 'u32[72,128]{1,0:T(1,128)}', space=vmem, size = 0x9000, scoped, tag = 'internal scratch']
  %s0 = inlined_call_operand.vmem [shape: bf16[64,64], index: 0, kind: input, shape index: {}]
  %s1 = inlined_call_operand.vmem [shape: bf16[64,512], index: 1, kind: input, shape index: {}]
  %s2 = inlined_call_operand.vmem [shape: f32[1,512], index: 2, kind: input, shape index: {}]
  %s3 = inlined_call_operand.vmem [shape: bf16[64,512], index: 3, kind: output, shape index: {}]
  %s4 = sld [smem:[#allocation0]]
  $region22: #{elmo_lstm_encoder.3} parent=0
    _
  %s6 = ssub.s32 1, %s4
  %s7 = scalar_select 0, %s6, %s4
  // Predicated region
  $region2: #{elmo_lstm_encoder.3} parent=0 // pred_check
    _
  $region3: #{elmo_lstm_encoder.3} parent=0 // pred_check_branch
    %9 = sbr.rel (0) target = $region5
  $region4: #{elmo_lstm_encoder.3} parent=0 // pred_region
    _
  $region5: #{elmo_lstm_encoder.3} parent=0 // pred_fallthru
    _
  // Predicated region
  $region6: #{elmo_lstm_encoder.3} parent=0 // pred_check
    _
  $region7: #{elmo_lstm_encoder.3} parent=0 // pred_check_branch
    %11 = sbr.rel (0) target = $region9
  $region8: #{elmo_lstm_encoder.3} parent=0 // pred_region
    _
  $region9: #{elmo_lstm_encoder.3} parent=0 // pred_fallthru
    _
  // Predicated region
  $region10: #{elmo_lstm_encoder.3} parent=0 // pred_check
    _
  $region11: #{elmo_lstm_encoder.3} parent=0 // pred_check_branch
    %13 = sbr.rel (0) target = $region13
  $region12: #{elmo_lstm_encoder.3} parent=0 // pred_region
    _
  $region13: #{elmo_lstm_encoder.3} parent=0 // pred_fallthru
    _
  %v15 = vld [vmem:[%s0] sm:$0xf]
  %v16 = vld [vmem:[%s0 + $0x4] sm:$0xf]
  %v17 = vld [vmem:[%s0 + $0x8] sm:$0xf]
  %v18 = vld [vmem:[%s0 + $0xc] sm:$0xf]
  %v19 = vld [vmem:[%s0 + $0x10] sm:$0xf]
  %v20 = vld [vmem:[%s0 + $0x14] sm:$0xf]
  %v21 = vld [vmem:[%s0 + $0x18] sm:$0xf]
  %v22 = vld [vmem:[%s0 + $0x1c] sm:$0xf]
  %v23 = vld [vmem:[%s1] sm:$0xff]
  %v24 = vld [vmem:[%s1 + $0x8] sm:$0xff]
  %v25 = vld [vmem:[%s1 + $0x10] sm:$0xff]
  %v26 = vld [vmem:[%s1 + $0x18] sm:$0xff]
  %v27 = vld [vmem:[%s1 + $0x20] sm:$0xff]
  %v28 = vld [vmem:[%s1 + $0x28] sm:$0xff]
  %v29 = vld [vmem:[%s1 + $0x30] sm:$0xff]
  %v30 = vld [vmem:[%s1 + $0x38] sm:$0xff]
  %v31 = vld [vmem:[%s1 + $0x40] sm:$0xff]
  %v32 = vld [vmem:[%s1 + $0x48] sm:$0xff]
  %v33 = vld [vmem:[%s1 + $0x50] sm:$0xff]
  %v34 = vld [vmem:[%s1 + $0x58] sm:$0xff]
  %v35 = vld [vmem:[%s1 + $0x60] sm:$0xff]
  %v36 = vld [vmem:[%s1 + $0x68] sm:$0xff]
  %v37 = vld [vmem:[%s1 + $0x70] sm:$0xff]
  %v38 = vld [vmem:[%s1 + $0x78] sm:$0xff]
  %v39 = vld [vmem:[%s2] sm:$0xf]
  %v41 = vperm.slane %v39, 0
  %v42 = vperm.slane %v39, 1
  %v43 = vperm.slane %v39, 2
  %v44 = vperm.slane %v39, 3
  %v57 = vunpack.c.l.b16 %v15
  %v58 = vunpack.c.l.b16 %v16
  %v59 = vunpack.c.l.b16 %v17
  %v60 = vunpack.c.l.b16 %v18
  %v61 = vunpack.c.l.b16 %v19
  %v62 = vunpack.c.l.b16 %v20
  %v63 = vunpack.c.l.b16 %v21
  %v64 = vunpack.c.l.b16 %v22
  %v65 = vpack.c.b16 %v58, %v57
  %v66 = vpack.c.b16 %v60, %v59
  %v67 = vpack.c.b16 %v62, %v61
  %v68 = vpack.c.b16 %v64, %v63
  %v85 = vunpack.c.l.b16 %v23
  %v86 = vunpack.c.h.b16 %v23
  %v87 = vunpack.c.l.b16 %v24
  %v88 = vunpack.c.h.b16 %v24
  %v89 = vunpack.c.l.b16 %v25
  %v90 = vunpack.c.h.b16 %v25
  %v91 = vunpack.c.l.b16 %v26
  %v92 = vunpack.c.h.b16 %v26
  %v93 = vunpack.c.l.b16 %v27
  %v94 = vunpack.c.h.b16 %v27
  %v95 = vunpack.c.l.b16 %v28
  %v96 = vunpack.c.h.b16 %v28
  %v97 = vunpack.c.l.b16 %v29
  %v98 = vunpack.c.h.b16 %v29
  %v99 = vunpack.c.l.b16 %v30
  %v100 = vunpack.c.h.b16 %v30
  %v101 = vunpack.c.l.b16 %v31
  %v102 = vunpack.c.h.b16 %v31
  %v103 = vunpack.c.l.b16 %v32
  %v104 = vunpack.c.h.b16 %v32
  %v105 = vunpack.c.l.b16 %v33
  %v106 = vunpack.c.h.b16 %v33
  %v107 = vunpack.c.l.b16 %v34
  %v108 = vunpack.c.h.b16 %v34
  %v109 = vunpack.c.l.b16 %v35
  %v110 = vunpack.c.h.b16 %v35
  %v111 = vunpack.c.l.b16 %v36
  %v112 = vunpack.c.h.b16 %v36
  %v113 = vunpack.c.l.b16 %v37
  %v114 = vunpack.c.h.b16 %v37
  %v115 = vunpack.c.l.b16 %v38
  %v116 = vunpack.c.h.b16 %v38
  %v117 = vpack.c.b16 %v89, %v85
  %v118 = vpack.c.b16 %v90, %v86
  %v119 = vpack.c.b16 %v91, %v87
  %v120 = vpack.c.b16 %v92, %v88
  %v121 = vpack.c.b16 %v97, %v93
  %v122 = vpack.c.b16 %v98, %v94
  %v123 = vpack.c.b16 %v99, %v95
  %v124 = vpack.c.b16 %v100, %v96
  %v125 = vpack.c.b16 %v105, %v101
  %v126 = vpack.c.b16 %v106, %v102
  %v127 = vpack.c.b16 %v107, %v103
  %v128 = vpack.c.b16 %v108, %v104
  %v129 = vpack.c.b16 %v113, %v109
  %v130 = vpack.c.b16 %v114, %v110
  %v131 = vpack.c.b16 %v115, %v111
  %v132 = vpack.c.b16 %v116, %v112
  %vm149 = vcmask 523264
  %v151 = vsel %vm149, %v65, 0
  %v154 = vsel %vm149, %v66, 0
  %v157 = vsel %vm149, %v67, 0
  %v160 = vsel %vm149, %v68, 0
  %162 = vmatpush.bf16.msra.mxu0 0
  %163 = vmatpush.bf16.msra.mxu0 0
  %164 = vmatpush.bf16.msra.mxu0 0
  %165 = vmatpush.bf16.msra.mxu0 0
  %166 = vmatpush.bf16.msra.mxu0 %v129
  %167 = vmatpush.bf16.msra.mxu0 %v125
  %168 = vmatpush.bf16.msra.mxu0 %v121
  %169 = vmatpush.bf16.msra.mxu0 %v117
  %170 = vmatmul.bf16.gmra.mxu0 %v151
  %v171 = vpop.f32.mrf.mxu0
  %v172 = vadd.f32 %v41, %v171
  %v173 = vpop.f32.mrf.mxu0
  %v174 = vadd.f32 %v41, %v173
  %175 = vmatmul.bf16.gmra.mxu0 %v154
  %v176 = vpop.f32.mrf.mxu0
  %v177 = vadd.f32 %v41, %v176
  %v178 = vpop.f32.mrf.mxu0
  %v179 = vadd.f32 %v41, %v178
  %180 = vmatmul.bf16.gmra.mxu0 %v157
  %v181 = vpop.f32.mrf.mxu0
  %v182 = vadd.f32 %v41, %v181
  %v183 = vpop.f32.mrf.mxu0
  %v184 = vadd.f32 %v41, %v183
  %185 = vmatmul.bf16.gmra.mxu0 %v160
  %v186 = vpop.f32.mrf.mxu0
  %v187 = vadd.f32 %v41, %v186
  %v188 = vpop.f32.mrf.mxu0
  %v189 = vadd.f32 %v41, %v188
  %190 = vdwg.mxu0
  %191 = vmatpush.bf16.msra.mxu0 0
  %192 = vmatpush.bf16.msra.mxu0 0
  %193 = vmatpush.bf16.msra.mxu0 0
  %194 = vmatpush.bf16.msra.mxu0 0
  %195 = vmatpush.bf16.msra.mxu0 %v130
  %196 = vmatpush.bf16.msra.mxu0 %v126
  %197 = vmatpush.bf16.msra.mxu0 %v122
  %198 = vmatpush.bf16.msra.mxu0 %v118
  %199 = vmatmul.bf16.gmra.mxu0 %v151
  %v200 = vpop.f32.mrf.mxu0
  %v201 = vadd.f32 %v42, %v200
  %v202 = vpop.f32.mrf.mxu0
  %v203 = vadd.f32 %v42, %v202
  %204 = vmatmul.bf16.gmra.mxu0 %v154
  %v205 = vpop.f32.mrf.mxu0
  %v206 = vadd.f32 %v42, %v205
  %v207 = vpop.f32.mrf.mxu0
  %v208 = vadd.f32 %v42, %v207
  %209 = vmatmul.bf16.gmra.mxu0 %v157
  %v210 = vpop.f32.mrf.mxu0
  %v211 = vadd.f32 %v42, %v210
  %v212 = vpop.f32.mrf.mxu0
  %v213 = vadd.f32 %v42, %v212
  %214 = vmatmul.bf16.gmra.mxu0 %v160
  %v215 = vpop.f32.mrf.mxu0
  %v216 = vadd.f32 %v42, %v215
  %v217 = vpop.f32.mrf.mxu0
  %v218 = vadd.f32 %v42, %v217
  %219 = vdwg.mxu0
  %220 = vmatpush.bf16.msra.mxu0 0
  %221 = vmatpush.bf16.msra.mxu0 0
  %222 = vmatpush.bf16.msra.mxu0 0
  %223 = vmatpush.bf16.msra.mxu0 0
  %224 = vmatpush.bf16.msra.mxu0 %v131
  %225 = vmatpush.bf16.msra.mxu0 %v127
  %226 = vmatpush.bf16.msra.mxu0 %v123
  %227 = vmatpush.bf16.msra.mxu0 %v119
  %228 = vmatmul.bf16.gmra.mxu0 %v151
  %v229 = vpop.f32.mrf.mxu0
  %v230 = vadd.f32 %v43, %v229
  %v231 = vpop.f32.mrf.mxu0
  %v232 = vadd.f32 %v43, %v231
  %233 = vmatmul.bf16.gmra.mxu0 %v154
  %v234 = vpop.f32.mrf.mxu0
  %v235 = vadd.f32 %v43, %v234
  %v236 = vpop.f32.mrf.mxu0
  %v237 = vadd.f32 %v43, %v236
  %238 = vmatmul.bf16.gmra.mxu0 %v157
  %v239 = vpop.f32.mrf.mxu0
  %v240 = vadd.f32 %v43, %v239
  %v241 = vpop.f32.mrf.mxu0
  %v242 = vadd.f32 %v43, %v241
  %243 = vmatmul.bf16.gmra.mxu0 %v160
  %v244 = vpop.f32.mrf.mxu0
  %v245 = vadd.f32 %v43, %v244
  %v246 = vpop.f32.mrf.mxu0
  %v247 = vadd.f32 %v43, %v246
  %248 = vdwg.mxu0
  %249 = vmatpush.bf16.msra.mxu0 0
  %250 = vmatpush.bf16.msra.mxu0 0
  %251 = vmatpush.bf16.msra.mxu0 0
  %252 = vmatpush.bf16.msra.mxu0 0
  %253 = vmatpush.bf16.msra.mxu0 %v132
  %254 = vmatpush.bf16.msra.mxu0 %v128
  %255 = vmatpush.bf16.msra.mxu0 %v124
  %256 = vmatpush.bf16.msra.mxu0 %v120
  %257 = vmatmul.bf16.gmra.mxu0 %v151
  %v258 = vpop.f32.mrf.mxu0
  %v259 = vadd.f32 %v44, %v258
  %v260 = vpop.f32.mrf.mxu0
  %v261 = vadd.f32 %v44, %v260
  %262 = vmatmul.bf16.gmra.mxu0 %v154
  %v263 = vpop.f32.mrf.mxu0
  %v264 = vadd.f32 %v44, %v263
  %v265 = vpop.f32.mrf.mxu0
  %v266 = vadd.f32 %v44, %v265
  %267 = vmatmul.bf16.gmra.mxu0 %v157
  %v268 = vpop.f32.mrf.mxu0
  %v269 = vadd.f32 %v44, %v268
  %v270 = vpop.f32.mrf.mxu0
  %v271 = vadd.f32 %v44, %v270
  %272 = vmatmul.bf16.gmra.mxu0 %v160
  %v273 = vpop.f32.mrf.mxu0
  %v274 = vadd.f32 %v44, %v273
  %v275 = vpop.f32.mrf.mxu0
  %v276 = vadd.f32 %v44, %v275
  %277 = vdwg.mxu0
  %v278 = vpack.c.bf16 %v201, %v172
  %v279 = vpack.c.bf16 %v259, %v230
  %v280 = vpack.c.bf16 %v203, %v174
  %v281 = vpack.c.bf16 %v261, %v232
  %v282 = vpack.c.bf16 %v206, %v177
  %v283 = vpack.c.bf16 %v264, %v235
  %v284 = vpack.c.bf16 %v208, %v179
  %v285 = vpack.c.bf16 %v266, %v237
  %v286 = vpack.c.bf16 %v211, %v182
  %v287 = vpack.c.bf16 %v269, %v240
  %v288 = vpack.c.bf16 %v213, %v184
  %v289 = vpack.c.bf16 %v271, %v242
  %v290 = vpack.c.bf16 %v216, %v187
  %v291 = vpack.c.bf16 %v274, %v245
  %v292 = vpack.c.bf16 %v218, %v189
  %v293 = vpack.c.bf16 %v276, %v247
  %294 = vst [vmem:[%s3] sm:$0xff] %v278
  %295 = vst [vmem:[%s3 + $0x8] sm:$0xff] %v279
  %296 = vst [vmem:[%s3 + $0x10] sm:$0xff] %v280
  %297 = vst [vmem:[%s3 + $0x18] sm:$0xff] %v281
  %298 = vst [vmem:[%s3 + $0x20] sm:$0xff] %v282
  %299 = vst [vmem:[%s3 + $0x28] sm:$0xff] %v283
  %300 = vst [vmem:[%s3 + $0x30] sm:$0xff] %v284
  %301 = vst [vmem:[%s3 + $0x38] sm:$0xff] %v285
  %302 = vst [vmem:[%s3 + $0x40] sm:$0xff] %v286
  %303 = vst [vmem:[%s3 + $0x48] sm:$0xff] %v287
  %304 = vst [vmem:[%s3 + $0x50] sm:$0xff] %v288
  %305 = vst [vmem:[%s3 + $0x58] sm:$0xff] %v289
  %306 = vst [vmem:[%s3 + $0x60] sm:$0xff] %v290
  %307 = vst [vmem:[%s3 + $0x68] sm:$0xff] %v291
  %308 = vst [vmem:[%s3 + $0x70] sm:$0xff] %v292
  %309 = vst [vmem:[%s3 + $0x78] sm:$0xff] %v293
  // Predicated region
  $region14: #{elmo_lstm_encoder.3} parent=0 // pred_check
    _
  $region15: #{elmo_lstm_encoder.3} parent=0 // pred_check_branch
    %311 = sbr.rel (0) target = $region17
  $region16: #{elmo_lstm_encoder.3} parent=0 // pred_region
    _
  $region17: #{elmo_lstm_encoder.3} parent=0 // pred_fallthru
    _
  // Predicated region
  $region18: #{elmo_lstm_encoder.3} parent=0 // pred_check
    _
  $region19: #{elmo_lstm_encoder.3} parent=0 // pred_check_branch
    %313 = sbr.rel (0) target = $region21
  $region20: #{elmo_lstm_encoder.3} parent=0 // pred_region
    _
  $region21: #{elmo_lstm_encoder.3} parent=0 // pred_fallthru
    _

// kernel: elmo_lstm_encoder.5
$region0: #{elmo_lstm_encoder.5}
  #allocation0 [shape = 'u32[]', space=smem, size = 0x4, offset = 0x4, fixed_abs, tag = 'smem constant byte address 0x4 - core index']
  #allocation1 [shape = 'u32[72,128]{1,0:T(1,128)}', space=vmem, size = 0x9000, scoped, tag = 'internal scratch']
  %s0 = inlined_call_operand.vmem [shape: bf16[64,128], index: 0, kind: input, shape index: {}]
  %s1 = inlined_call_operand.vmem [shape: bf16[128,128], index: 1, kind: input, shape index: {}]
  %s2 = inlined_call_operand.vmem [shape: f32[1,128], index: 2, kind: input, shape index: {}]
  %s3 = inlined_call_operand.vmem [shape: f32[64,128], index: 3, kind: output, shape index: {}]
  %s4 = sld [smem:[#allocation0]]
  $region22: #{elmo_lstm_encoder.5} parent=0
    _
  %s6 = ssub.s32 1, %s4
  %s7 = scalar_select 0, %s6, %s4
  // Predicated region
  $region2: #{elmo_lstm_encoder.5} parent=0 // pred_check
    _
  $region3: #{elmo_lstm_encoder.5} parent=0 // pred_check_branch
    %9 = sbr.rel (0) target = $region5
  $region4: #{elmo_lstm_encoder.5} parent=0 // pred_region
    _
  $region5: #{elmo_lstm_encoder.5} parent=0 // pred_fallthru
    _
  // Predicated region
  $region6: #{elmo_lstm_encoder.5} parent=0 // pred_check
    _
  $region7: #{elmo_lstm_encoder.5} parent=0 // pred_check_branch
    %11 = sbr.rel (0) target = $region9
  $region8: #{elmo_lstm_encoder.5} parent=0 // pred_region
    _
  $region9: #{elmo_lstm_encoder.5} parent=0 // pred_fallthru
    _
  // Predicated region
  $region10: #{elmo_lstm_encoder.5} parent=0 // pred_check
    _
  $region11: #{elmo_lstm_encoder.5} parent=0 // pred_check_branch
    %13 = sbr.rel (0) target = $region13
  $region12: #{elmo_lstm_encoder.5} parent=0 // pred_region
    _
  $region13: #{elmo_lstm_encoder.5} parent=0 // pred_fallthru
    _
  %v14 = vld [vmem:[%s0] sm:$0xf]
  %v15 = vld [vmem:[%s0 + $0x4] sm:$0xf]
  %v16 = vld [vmem:[%s0 + $0x8] sm:$0xf]
  %v17 = vld [vmem:[%s0 + $0xc] sm:$0xf]
  %v18 = vld [vmem:[%s0 + $0x10] sm:$0xf]
  %v19 = vld [vmem:[%s0 + $0x14] sm:$0xf]
  %v20 = vld [vmem:[%s0 + $0x18] sm:$0xf]
  %v21 = vld [vmem:[%s0 + $0x1c] sm:$0xf]
  %v22 = vld [vmem:[%s1] sm:$0xf]
  %v23 = vld [vmem:[%s1 + $0x4] sm:$0xf]
  %v24 = vld [vmem:[%s1 + $0x8] sm:$0xf]
  %v25 = vld [vmem:[%s1 + $0xc] sm:$0xf]
  %v26 = vld [vmem:[%s1 + $0x10] sm:$0xf]
  %v27 = vld [vmem:[%s1 + $0x14] sm:$0xf]
  %v28 = vld [vmem:[%s1 + $0x18] sm:$0xf]
  %v29 = vld [vmem:[%s1 + $0x1c] sm:$0xf]
  %v30 = vld [vmem:[%s1 + $0x20] sm:$0xf]
  %v31 = vld [vmem:[%s1 + $0x24] sm:$0xf]
  %v32 = vld [vmem:[%s1 + $0x28] sm:$0xf]
  %v33 = vld [vmem:[%s1 + $0x2c] sm:$0xf]
  %v34 = vld [vmem:[%s1 + $0x30] sm:$0xf]
  %v35 = vld [vmem:[%s1 + $0x34] sm:$0xf]
  %v36 = vld [vmem:[%s1 + $0x38] sm:$0xf]
  %v37 = vld [vmem:[%s1 + $0x3c] sm:$0xf]
  %v38 = vld [vmem:[%s2] sm:$0x1]
  %v40 = vperm.slane %v38, 0
  %v50 = vunpack.c.l.b16 %v14
  %v51 = vunpack.c.l.b16 %v15
  %v52 = vunpack.c.l.b16 %v16
  %v53 = vunpack.c.l.b16 %v17
  %v54 = vunpack.c.l.b16 %v18
  %v55 = vunpack.c.l.b16 %v19
  %v56 = vunpack.c.l.b16 %v20
  %v57 = vunpack.c.l.b16 %v21
  %v58 = vpack.c.b16 %v51, %v50
  %v59 = vpack.c.b16 %v53, %v52
  %v60 = vpack.c.b16 %v55, %v54
  %v61 = vpack.c.b16 %v57, %v56
  %v82 = vunpack.c.l.b16 %v22
  %v83 = vunpack.c.l.b16 %v23
  %v84 = vunpack.c.l.b16 %v24
  %v85 = vunpack.c.l.b16 %v25
  %v86 = vunpack.c.l.b16 %v26
  %v87 = vunpack.c.l.b16 %v27
  %v88 = vunpack.c.l.b16 %v28
  %v89 = vunpack.c.l.b16 %v29
  %v90 = vunpack.c.l.b16 %v30
  %v91 = vunpack.c.l.b16 %v31
  %v92 = vunpack.c.l.b16 %v32
  %v93 = vunpack.c.l.b16 %v33
  %v94 = vunpack.c.l.b16 %v34
  %v95 = vunpack.c.l.b16 %v35
  %v96 = vunpack.c.l.b16 %v36
  %v97 = vunpack.c.l.b16 %v37
  %v98 = vpack.c.b16 %v83, %v82
  %v99 = vpack.c.b16 %v85, %v84
  %v100 = vpack.c.b16 %v87, %v86
  %v101 = vpack.c.b16 %v89, %v88
  %v102 = vpack.c.b16 %v91, %v90
  %v103 = vpack.c.b16 %v93, %v92
  %v104 = vpack.c.b16 %v95, %v94
  %v105 = vpack.c.b16 %v97, %v96
  %114 = vmatpush.bf16.msra.mxu0 %v105
  %115 = vmatpush.bf16.msra.mxu0 %v104
  %116 = vmatpush.bf16.msra.mxu0 %v103
  %117 = vmatpush.bf16.msra.mxu0 %v102
  %118 = vmatpush.bf16.msra.mxu0 %v101
  %119 = vmatpush.bf16.msra.mxu0 %v100
  %120 = vmatpush.bf16.msra.mxu0 %v99
  %121 = vmatpush.bf16.msra.mxu0 %v98
  %122 = vmatmul.bf16.gmra.mxu0 %v58
  %v123 = vpop.f32.mrf.mxu0
  %v124 = vadd.f32 %v40, %v123
  %v125 = vpop.f32.mrf.mxu0
  %v126 = vadd.f32 %v40, %v125
  %127 = vmatmul.bf16.gmra.mxu0 %v59
  %v128 = vpop.f32.mrf.mxu0
  %v129 = vadd.f32 %v40, %v128
  %v130 = vpop.f32.mrf.mxu0
  %v131 = vadd.f32 %v40, %v130
  %132 = vmatmul.bf16.gmra.mxu0 %v60
  %v133 = vpop.f32.mrf.mxu0
  %v134 = vadd.f32 %v40, %v133
  %v135 = vpop.f32.mrf.mxu0
  %v136 = vadd.f32 %v40, %v135
  %137 = vmatmul.bf16.gmra.mxu0 %v61
  %v138 = vpop.f32.mrf.mxu0
  %v139 = vadd.f32 %v40, %v138
  %v140 = vpop.f32.mrf.mxu0
  %v141 = vadd.f32 %v40, %v140
  %142 = vdwg.mxu0
  %143 = vst [vmem:[%s3] sm:$0xff] %v124
  %144 = vst [vmem:[%s3 + $0x8] sm:$0xff] %v126
  %145 = vst [vmem:[%s3 + $0x10] sm:$0xff] %v129
  %146 = vst [vmem:[%s3 + $0x18] sm:$0xff] %v131
  %147 = vst [vmem:[%s3 + $0x20] sm:$0xff] %v134
  %148 = vst [vmem:[%s3 + $0x28] sm:$0xff] %v136
  %149 = vst [vmem:[%s3 + $0x30] sm:$0xff] %v139
  %150 = vst [vmem:[%s3 + $0x38] sm:$0xff] %v141
  // Predicated region
  $region14: #{elmo_lstm_encoder.5} parent=0 // pred_check
    _
  $region15: #{elmo_lstm_encoder.5} parent=0 // pred_check_branch
    %152 = sbr.rel (0) target = $region17
  $region16: #{elmo_lstm_encoder.5} parent=0 // pred_region
    _
  $region17: #{elmo_lstm_encoder.5} parent=0 // pred_fallthru
    _
  // Predicated region
  $region18: #{elmo_lstm_encoder.5} parent=0 // pred_check
    _
  $region19: #{elmo_lstm_encoder.5} parent=0 // pred_check_branch
    %154 = sbr.rel (0) target = $region21
  $region20: #{elmo_lstm_encoder.5} parent=0 // pred_region
    _
  $region21: #{elmo_lstm_encoder.5} parent=0 // pred_fallthru
    _

// kernel: elmo_lstm_encoder.4
$region0: #{elmo_lstm_encoder.4}
  #allocation0 [shape = 'u32[]', space=smem, size = 0x4, offset = 0x4, fixed_abs, tag = 'smem constant byte address 0x4 - core index']
  #allocation1 [shape = 'u32[72,128]{1,0:T(1,128)}', space=vmem, size = 0x9000, scoped, tag = 'internal scratch']
  #allocation2 [shape = 'f32[8,128]{1,0:T(8,128)}', space=vmem, size = 0x1000, scoped, tag = 'scratch operand']
  #allocation3 [shape = 'f32[8,128]{1,0:T(8,128)}', space=vmem, size = 0x1000, scoped, tag = 'scratch operand']
  %s0 = inlined_call_operand.vmem [shape: bf16[8,8,512], index: 0, kind: input, shape index: {}]
  %s1 = inlined_call_operand.vmem [shape: bf16[128,512], index: 1, kind: input, shape index: {}]
  %s2 = inlined_call_operand.vmem [shape: s32[8,1], index: 2, kind: input, shape index: {}]
  %s3 = inlined_call_operand.vmem [shape: bf16[8,8,128], index: 3, kind: output, shape index: {}]
  %s4 = sld [smem:[#allocation0]]
  $region26: #{elmo_lstm_encoder.4} parent=0
    _
  %s6 = ssub.s32 1, %s4
  %s7 = scalar_select 0, %s6, %s4
  // Predicated region
  $region2: #{elmo_lstm_encoder.4} parent=0 // pred_check
    _
  $region3: #{elmo_lstm_encoder.4} parent=0 // pred_check_branch
    %9 = sbr.rel (0) target = $region5
  $region4: #{elmo_lstm_encoder.4} parent=0 // pred_region
    _
  $region5: #{elmo_lstm_encoder.4} parent=0 // pred_fallthru
    _
  // Predicated region
  $region6: #{elmo_lstm_encoder.4} parent=0 // pred_check
    _
  $region7: #{elmo_lstm_encoder.4} parent=0 // pred_check_branch
    %11 = sbr.rel (0) target = $region9
  $region8: #{elmo_lstm_encoder.4} parent=0 // pred_region
    _
  $region9: #{elmo_lstm_encoder.4} parent=0 // pred_fallthru
    _
  // Predicated region
  $region10: #{elmo_lstm_encoder.4} parent=0 // pred_check
    _
  $region11: #{elmo_lstm_encoder.4} parent=0 // pred_check_branch
    %13 = sbr.rel (0) target = $region13
  $region12: #{elmo_lstm_encoder.4} parent=0 // pred_region
    _
  $region13: #{elmo_lstm_encoder.4} parent=0 // pred_fallthru
    _
  %s14 = smul.u32 0, 8
  %p15 = scmp.eq.s32.totalorder 0, 0
  // Predicated region
  $region14: #{elmo_lstm_encoder.4} parent=0 // pred_check
    %p16 = pneg %p15
  $region15: #{elmo_lstm_encoder.4} parent=0 // pred_check_branch
    %18 = sbr.rel (%p16) target = $region17
  $region16: #{elmo_lstm_encoder.4} parent=0 // pred_region
    %19 = vst [vmem:[#allocation2] sm:$0xff] 0.0
    %20 = vst [vmem:[#allocation3] sm:$0xff] 0.0
  $region17: #{elmo_lstm_encoder.4} parent=0 // pred_fallthru
    _
  %v21 = vld [vmem:[%s1] sm:$0xff]
  %v22 = vld [vmem:[%s1 + $0x8] sm:$0xff]
  %v23 = vld [vmem:[%s1 + $0x10] sm:$0xff]
  %v24 = vld [vmem:[%s1 + $0x18] sm:$0xff]
  %v25 = vld [vmem:[%s1 + $0x20] sm:$0xff]
  %v26 = vld [vmem:[%s1 + $0x28] sm:$0xff]
  %v27 = vld [vmem:[%s1 + $0x30] sm:$0xff]
  %v28 = vld [vmem:[%s1 + $0x38] sm:$0xff]
  %v29 = vld [vmem:[%s1 + $0x40] sm:$0xff]
  %v30 = vld [vmem:[%s1 + $0x48] sm:$0xff]
  %v31 = vld [vmem:[%s1 + $0x50] sm:$0xff]
  %v32 = vld [vmem:[%s1 + $0x58] sm:$0xff]
  %v33 = vld [vmem:[%s1 + $0x60] sm:$0xff]
  %v34 = vld [vmem:[%s1 + $0x68] sm:$0xff]
  %v35 = vld [vmem:[%s1 + $0x70] sm:$0xff]
  %v36 = vld [vmem:[%s1 + $0x78] sm:$0xff]
  %v37 = vld [vmem:[%s1 + $0x80] sm:$0xff]
  %v38 = vld [vmem:[%s1 + $0x88] sm:$0xff]
  %v39 = vld [vmem:[%s1 + $0x90] sm:$0xff]
  %v40 = vld [vmem:[%s1 + $0x98] sm:$0xff]
  %v41 = vld [vmem:[%s1 + $0xa0] sm:$0xff]
  %v42 = vld [vmem:[%s1 + $0xa8] sm:$0xff]
  %v43 = vld [vmem:[%s1 + $0xb0] sm:$0xff]
  %v44 = vld [vmem:[%s1 + $0xb8] sm:$0xff]
  %v45 = vld [vmem:[%s1 + $0xc0] sm:$0xff]
  %v46 = vld [vmem:[%s1 + $0xc8] sm:$0xff]
  %v47 = vld [vmem:[%s1 + $0xd0] sm:$0xff]
  %v48 = vld [vmem:[%s1 + $0xd8] sm:$0xff]
  %v49 = vld [vmem:[%s1 + $0xe0] sm:$0xff]
  %v50 = vld [vmem:[%s1 + $0xe8] sm:$0xff]
  %v51 = vld [vmem:[%s1 + $0xf0] sm:$0xff]
  %v52 = vld [vmem:[%s1 + $0xf8] sm:$0xff]
  %v53 = vld [vmem:[%s2] sm:$0xff]
  %v54 = vld [vmem:[#allocation2] sm:$0xff]
  %v55 = vld [vmem:[#allocation3] sm:$0xff]
  %v56 = vld [vmem:[%s0] sm:$0xff]
  %v57 = vld [vmem:[%s0 + $0x8] sm:$0xff]
  %v58 = vunpack.c.l.bf16 %v56
  %v59 = vunpack.c.h.bf16 %v56
  %v60 = vunpack.c.l.bf16 %v57
  %v61 = vunpack.c.h.bf16 %v57
  %v62 = vpack.c.bf16 %v54, %v54
  %v95 = vunpack.c.l.b16 %v21
  %v96 = vunpack.c.h.b16 %v21
  %v97 = vunpack.c.l.b16 %v22
  %v98 = vunpack.c.h.b16 %v22
  %v99 = vunpack.c.l.b16 %v23
  %v100 = vunpack.c.h.b16 %v23
  %v101 = vunpack.c.l.b16 %v24
  %v102 = vunpack.c.h.b16 %v24
  %v103 = vunpack.c.l.b16 %v25
  %v104 = vunpack.c.h.b16 %v25
  %v105 = vunpack.c.l.b16 %v26
  %v106 = vunpack.c.h.b16 %v26
  %v107 = vunpack.c.l.b16 %v27
  %v108 = vunpack.c.h.b16 %v27
  %v109 = vunpack.c.l.b16 %v28
  %v110 = vunpack.c.h.b16 %v28
  %v111 = vunpack.c.l.b16 %v29
  %v112 = vunpack.c.h.b16 %v29
  %v113 = vunpack.c.l.b16 %v30
  %v114 = vunpack.c.h.b16 %v30
  %v115 = vunpack.c.l.b16 %v31
  %v116 = vunpack.c.h.b16 %v31
  %v117 = vunpack.c.l.b16 %v32
  %v118 = vunpack.c.h.b16 %v32
  %v119 = vunpack.c.l.b16 %v33
  %v120 = vunpack.c.h.b16 %v33
  %v121 = vunpack.c.l.b16 %v34
  %v122 = vunpack.c.h.b16 %v34
  %v123 = vunpack.c.l.b16 %v35
  %v124 = vunpack.c.h.b16 %v35
  %v125 = vunpack.c.l.b16 %v36
  %v126 = vunpack.c.h.b16 %v36
  %v127 = vunpack.c.l.b16 %v37
  %v128 = vunpack.c.h.b16 %v37
  %v129 = vunpack.c.l.b16 %v38
  %v130 = vunpack.c.h.b16 %v38
  %v131 = vunpack.c.l.b16 %v39
  %v132 = vunpack.c.h.b16 %v39
  %v133 = vunpack.c.l.b16 %v40
  %v134 = vunpack.c.h.b16 %v40
  %v135 = vunpack.c.l.b16 %v41
  %v136 = vunpack.c.h.b16 %v41
  %v137 = vunpack.c.l.b16 %v42
  %v138 = vunpack.c.h.b16 %v42
  %v139 = vunpack.c.l.b16 %v43
  %v140 = vunpack.c.h.b16 %v43
  %v141 = vunpack.c.l.b16 %v44
  %v142 = vunpack.c.h.b16 %v44
  %v143 = vunpack.c.l.b16 %v45
  %v144 = vunpack.c.h.b16 %v45
  %v145 = vunpack.c.l.b16 %v46
  %v146 = vunpack.c.h.b16 %v46
  %v147 = vunpack.c.l.b16 %v47
  %v148 = vunpack.c.h.b16 %v47
  %v149 = vunpack.c.l.b16 %v48
  %v150 = vunpack.c.h.b16 %v48
  %v151 = vunpack.c.l.b16 %v49
  %v152 = vunpack.c.h.b16 %v49
  %v153 = vunpack.c.l.b16 %v50
  %v154 = vunpack.c.h.b16 %v50
  %v155 = vunpack.c.l.b16 %v51
  %v156 = vunpack.c.h.b16 %v51
  %v157 = vunpack.c.l.b16 %v52
  %v158 = vunpack.c.h.b16 %v52
  %v159 = vpack.c.b16 %v99, %v95
  %v160 = vpack.c.b16 %v100, %v96
  %v161 = vpack.c.b16 %v101, %v97
  %v162 = vpack.c.b16 %v102, %v98
  %v163 = vpack.c.b16 %v107, %v103
  %v164 = vpack.c.b16 %v108, %v104
  %v165 = vpack.c.b16 %v109, %v105
  %v166 = vpack.c.b16 %v110, %v106
  %v167 = vpack.c.b16 %v115, %v111
  %v168 = vpack.c.b16 %v116, %v112
  %v169 = vpack.c.b16 %v117, %v113
  %v170 = vpack.c.b16 %v118, %v114
  %v171 = vpack.c.b16 %v123, %v119
  %v172 = vpack.c.b16 %v124, %v120
  %v173 = vpack.c.b16 %v125, %v121
  %v174 = vpack.c.b16 %v126, %v122
  %v175 = vpack.c.b16 %v131, %v127
  %v176 = vpack.c.b16 %v132, %v128
  %v177 = vpack.c.b16 %v133, %v129
  %v178 = vpack.c.b16 %v134, %v130
  %v179 = vpack.c.b16 %v139, %v135
  %v180 = vpack.c.b16 %v140, %v136
  %v181 = vpack.c.b16 %v141, %v137
  %v182 = vpack.c.b16 %v142, %v138
  %v183 = vpack.c.b16 %v147, %v143
  %v184 = vpack.c.b16 %v148, %v144
  %v185 = vpack.c.b16 %v149, %v145
  %v186 = vpack.c.b16 %v150, %v146
  %v187 = vpack.c.b16 %v155, %v151
  %v188 = vpack.c.b16 %v156, %v152
  %v189 = vpack.c.b16 %v157, %v153
  %v190 = vpack.c.b16 %v158, %v154
  %223 = vmatpush.bf16.msra.mxu0 %v187
  %224 = vmatpush.bf16.msra.mxu0 %v183
  %225 = vmatpush.bf16.msra.mxu0 %v179
  %226 = vmatpush.bf16.msra.mxu0 %v175
  %227 = vmatpush.bf16.msra.mxu0 %v171
  %228 = vmatpush.bf16.msra.mxu0 %v167
  %229 = vmatpush.bf16.msra.mxu0 %v163
  %230 = vmatpush.bf16.msra.mxu0 %v159
  %231 = vmatmul.bf16.gmra.mxu0 %v62
  %v232 = vpop.f32.mrf.mxu0
  %v233 = vadd.f32 0.0, %v232
  %v234 = vpop.f32.mrf.mxu0
  %235 = vdwg.mxu0
  %236 = vmatpush.bf16.msra.mxu0 %v188
  %237 = vmatpush.bf16.msra.mxu0 %v184
  %238 = vmatpush.bf16.msra.mxu0 %v180
  %239 = vmatpush.bf16.msra.mxu0 %v176
  %240 = vmatpush.bf16.msra.mxu0 %v172
  %241 = vmatpush.bf16.msra.mxu0 %v168
  %242 = vmatpush.bf16.msra.mxu0 %v164
  %243 = vmatpush.bf16.msra.mxu0 %v160
  %244 = vmatmul.bf16.gmra.mxu0 %v62
  %v245 = vpop.f32.mrf.mxu0
  %v246 = vadd.f32 0.0, %v245
  %v247 = vpop.f32.mrf.mxu0
  %248 = vdwg.mxu0
  %249 = vmatpush.bf16.msra.mxu0 %v189
  %250 = vmatpush.bf16.msra.mxu0 %v185
  %251 = vmatpush.bf16.msra.mxu0 %v181
  %252 = vmatpush.bf16.msra.mxu0 %v177
  %253 = vmatpush.bf16.msra.mxu0 %v173
  %254 = vmatpush.bf16.msra.mxu0 %v169
  %255 = vmatpush.bf16.msra.mxu0 %v165
  %256 = vmatpush.bf16.msra.mxu0 %v161
  %257 = vmatmul.bf16.gmra.mxu0 %v62
  %v258 = vpop.f32.mrf.mxu0
  %v259 = vadd.f32 0.0, %v258
  %v260 = vpop.f32.mrf.mxu0
  %261 = vdwg.mxu0
  %262 = vmatpush.bf16.msra.mxu0 %v190
  %263 = vmatpush.bf16.msra.mxu0 %v186
  %264 = vmatpush.bf16.msra.mxu0 %v182
  %265 = vmatpush.bf16.msra.mxu0 %v178
  %266 = vmatpush.bf16.msra.mxu0 %v174
  %267 = vmatpush.bf16.msra.mxu0 %v170
  %268 = vmatpush.bf16.msra.mxu0 %v166
  %269 = vmatpush.bf16.msra.mxu0 %v162
  %270 = vmatmul.bf16.gmra.mxu0 %v62
  %v271 = vpop.f32.mrf.mxu0
  %v272 = vadd.f32 0.0, %v271
  %v273 = vpop.f32.mrf.mxu0
  %274 = vdwg.mxu0
  %v275 = vadd.f32 %v58, %v233
  %v276 = vadd.f32 %v59, %v246
  %v277 = vadd.f32 %v60, %v259
  %v278 = vadd.f32 %v61, %v272
  %v279 = vsub.f32 0.0, %v275
  %v280 = vmul.f32 %v279, 1.442695
  %v281 = vpow.pop %v280
  %v282 = vadd.f32 %v281, 1.0
  %v283 = vrcp.pop %v282
  %v284 = vsub.f32 0.0, %v276
  %v285 = vmul.f32 %v284, 1.442695
  %v286 = vpow.pop %v285
  %v287 = vadd.f32 %v286, 1.0
  %v288 = vrcp.pop %v287
  %v289 = vtanh.pop %v277
  %v290 = vsub.f32 0.0, %v278
  %v291 = vmul.f32 %v290, 1.442695
  %v292 = vpow.pop %v291
  %v293 = vadd.f32 %v292, 1.0
  %v294 = vrcp.pop %v293
  %v295 = vmul.f32 %v288, %v55
  %v296 = vmul.f32 %v283, %v289
  %v297 = vadd.f32 %v295, %v296
  %v298 = vtanh.pop %v297
  %v299 = vmul.f32 %v294, %v298
  %v300 = vstv %s14
  %vm301 = vcmp.lt.s32.totalorder %v300, %v53
  %v302 = vsel %vm301, 1, 0
  %v303 = vcvt.s32.f32 %v302
  %305 = vset.pattern.permute.xlu0 0
  %306 = vperm.xlu0 %305, %v303
  %v307 = vpop.permute.xlu0 %306
  %v309 = vmul.f32 %v299, %v307
  %v310 = vpack.c.bf16 %v309, %v309
  %311 = vst [vmem:[%s3] sm:$0xf] %v310
  %s312 = scalar_lea.vmem %s0, 16
  %v313 = vld [vmem:[%s312] sm:$0xff]
  %v314 = vld [vmem:[%s312 + $0x8] sm:$0xff]
  %v315 = vunpack.c.l.bf16 %v313
  %v316 = vunpack.c.h.bf16 %v313
  %v317 = vunpack.c.l.bf16 %v314
  %v318 = vunpack.c.h.bf16 %v314
  %v319 = vpack.c.bf16 %v299, %v299
  %320 = vmatpush.bf16.msra.mxu0 %v187
  %321 = vmatpush.bf16.msra.mxu0 %v183
  %322 = vmatpush.bf16.msra.mxu0 %v179
  %323 = vmatpush.bf16.msra.mxu0 %v175
  %324 = vmatpush.bf16.msra.mxu0 %v171
  %325 = vmatpush.bf16.msra.mxu0 %v167
  %326 = vmatpush.bf16.msra.mxu0 %v163
  %327 = vmatpush.bf16.msra.mxu0 %v159
  %328 = vmatmul.bf16.gmra.mxu0 %v319
  %v329 = vpop.f32.mrf.mxu0
  %v330 = vadd.f32 0.0, %v329
  %v331 = vpop.f32.mrf.mxu0
  %332 = vdwg.mxu0
  %333 = vmatpush.bf16.msra.mxu0 %v188
  %334 = vmatpush.bf16.msra.mxu0 %v184
  %335 = vmatpush.bf16.msra.mxu0 %v180
  %336 = vmatpush.bf16.msra.mxu0 %v176
  %337 = vmatpush.bf16.msra.mxu0 %v172
  %338 = vmatpush.bf16.msra.mxu0 %v168
  %339 = vmatpush.bf16.msra.mxu0 %v164
  %340 = vmatpush.bf16.msra.mxu0 %v160
  %341 = vmatmul.bf16.gmra.mxu0 %v319
  %v342 = vpop.f32.mrf.mxu0
  %v343 = vadd.f32 0.0, %v342
  %v344 = vpop.f32.mrf.mxu0
  %345 = vdwg.mxu0
  %346 = vmatpush.bf16.msra.mxu0 %v189
  %347 = vmatpush.bf16.msra.mxu0 %v185
  %348 = vmatpush.bf16.msra.mxu0 %v181
  %349 = vmatpush.bf16.msra.mxu0 %v177
  %350 = vmatpush.bf16.msra.mxu0 %v173
  %351 = vmatpush.bf16.msra.mxu0 %v169
  %352 = vmatpush.bf16.msra.mxu0 %v165
  %353 = vmatpush.bf16.msra.mxu0 %v161
  %354 = vmatmul.bf16.gmra.mxu0 %v319
  %v355 = vpop.f32.mrf.mxu0
  %v356 = vadd.f32 0.0, %v355
  %v357 = vpop.f32.mrf.mxu0
  %358 = vdwg.mxu0
  %359 = vmatpush.bf16.msra.mxu0 %v190
  %360 = vmatpush.bf16.msra.mxu0 %v186
  %361 = vmatpush.bf16.msra.mxu0 %v182
  %362 = vmatpush.bf16.msra.mxu0 %v178
  %363 = vmatpush.bf16.msra.mxu0 %v174
  %364 = vmatpush.bf16.msra.mxu0 %v170
  %365 = vmatpush.bf16.msra.mxu0 %v166
  %366 = vmatpush.bf16.msra.mxu0 %v162
  %367 = vmatmul.bf16.gmra.mxu0 %v319
  %v368 = vpop.f32.mrf.mxu0
  %v369 = vadd.f32 0.0, %v368
  %v370 = vpop.f32.mrf.mxu0
  %371 = vdwg.mxu0
  %v372 = vadd.f32 %v315, %v330
  %v373 = vadd.f32 %v316, %v343
  %v374 = vadd.f32 %v317, %v356
  %v375 = vadd.f32 %v318, %v369
  %v376 = vsub.f32 0.0, %v372
  %v377 = vmul.f32 %v376, 1.442695
  %v378 = vpow.pop %v377
  %v379 = vadd.f32 %v378, 1.0
  %v380 = vrcp.pop %v379
  %v381 = vsub.f32 0.0, %v373
  %v382 = vmul.f32 %v381, 1.442695
  %v383 = vpow.pop %v382
  %v384 = vadd.f32 %v383, 1.0
  %v385 = vrcp.pop %v384
  %v386 = vtanh.pop %v374
  %v387 = vsub.f32 0.0, %v375
  %v388 = vmul.f32 %v387, 1.442695
  %v389 = vpow.pop %v388
  %v390 = vadd.f32 %v389, 1.0
  %v391 = vrcp.pop %v390
  %v392 = vmul.f32 %v385, %v297
  %v393 = vmul.f32 %v380, %v386
  %v394 = vadd.f32 %v392, %v393
  %v395 = vtanh.pop %v394
  %v396 = vmul.f32 %v391, %v395
  %s397 = sadd.s32 %s14, 1
  %v398 = vstv %s397
  %vm399 = vcmp.lt.s32.totalorder %v398, %v53
  %v400 = vsel %vm399, 1, 0
  %v401 = vcvt.s32.f32 %v400
  %403 = vset.pattern.permute.xlu0 0
  %404 = vperm.xlu0 %403, %v401
  %v405 = vpop.permute.xlu0 %404
  %v407 = vmul.f32 %v396, %v405
  %v408 = vpack.c.bf16 %v407, %v407
  %s409 = scalar_lea.vmem %s3, 4
  %410 = vst [vmem:[%s409] sm:$0xf] %v408
  %s411 = scalar_lea.vmem %s0, 32
  %v412 = vld [vmem:[%s411] sm:$0xff]
  %v413 = vld [vmem:[%s411 + $0x8] sm:$0xff]
  %v414 = vunpack.c.l.bf16 %v412
  %v415 = vunpack.c.h.bf16 %v412
  %v416 = vunpack.c.l.bf16 %v413
  %v417 = vunpack.c.h.bf16 %v413
  %v418 = vpack.c.bf16 %v396, %v396
  %419 = vmatpush.bf16.msra.mxu0 %v187
  %420 = vmatpush.bf16.msra.mxu0 %v183
  %421 = vmatpush.bf16.msra.mxu0 %v179
  %422 = vmatpush.bf16.msra.mxu0 %v175
  %423 = vmatpush.bf16.msra.mxu0 %v171
  %424 = vmatpush.bf16.msra.mxu0 %v167
  %425 = vmatpush.bf16.msra.mxu0 %v163
  %426 = vmatpush.bf16.msra.mxu0 %v159
  %427 = vmatmul.bf16.gmra.mxu0 %v418
  %v428 = vpop.f32.mrf.mxu0
  %v429 = vadd.f32 0.0, %v428
  %v430 = vpop.f32.mrf.mxu0
  %431 = vdwg.mxu0
  %432 = vmatpush.bf16.msra.mxu0 %v188
  %433 = vmatpush.bf16.msra.mxu0 %v184
  %434 = vmatpush.bf16.msra.mxu0 %v180
  %435 = vmatpush.bf16.msra.mxu0 %v176
  %436 = vmatpush.bf16.msra.mxu0 %v172
  %437 = vmatpush.bf16.msra.mxu0 %v168
  %438 = vmatpush.bf16.msra.mxu0 %v164
  %439 = vmatpush.bf16.msra.mxu0 %v160
  %440 = vmatmul.bf16.gmra.mxu0 %v418
  %v441 = vpop.f32.mrf.mxu0
  %v442 = vadd.f32 0.0, %v441
  %v443 = vpop.f32.mrf.mxu0
  %444 = vdwg.mxu0
  %445 = vmatpush.bf16.msra.mxu0 %v189
  %446 = vmatpush.bf16.msra.mxu0 %v185
  %447 = vmatpush.bf16.msra.mxu0 %v181
  %448 = vmatpush.bf16.msra.mxu0 %v177
  %449 = vmatpush.bf16.msra.mxu0 %v173
  %450 = vmatpush.bf16.msra.mxu0 %v169
  %451 = vmatpush.bf16.msra.mxu0 %v165
  %452 = vmatpush.bf16.msra.mxu0 %v161
  %453 = vmatmul.bf16.gmra.mxu0 %v418
  %v454 = vpop.f32.mrf.mxu0
  %v455 = vadd.f32 0.0, %v454
  %v456 = vpop.f32.mrf.mxu0
  %457 = vdwg.mxu0
  %458 = vmatpush.bf16.msra.mxu0 %v190
  %459 = vmatpush.bf16.msra.mxu0 %v186
  %460 = vmatpush.bf16.msra.mxu0 %v182
  %461 = vmatpush.bf16.msra.mxu0 %v178
  %462 = vmatpush.bf16.msra.mxu0 %v174
  %463 = vmatpush.bf16.msra.mxu0 %v170
  %464 = vmatpush.bf16.msra.mxu0 %v166
  %465 = vmatpush.bf16.msra.mxu0 %v162
  %466 = vmatmul.bf16.gmra.mxu0 %v418
  %v467 = vpop.f32.mrf.mxu0
  %v468 = vadd.f32 0.0, %v467
  %v469 = vpop.f32.mrf.mxu0
  %470 = vdwg.mxu0
  %v471 = vadd.f32 %v414, %v429
  %v472 = vadd.f32 %v415, %v442
  %v473 = vadd.f32 %v416, %v455
  %v474 = vadd.f32 %v417, %v468
  %v475 = vsub.f32 0.0, %v471
  %v476 = vmul.f32 %v475, 1.442695
  %v477 = vpow.pop %v476
  %v478 = vadd.f32 %v477, 1.0
  %v479 = vrcp.pop %v478
  %v480 = vsub.f32 0.0, %v472
  %v481 = vmul.f32 %v480, 1.442695
  %v482 = vpow.pop %v481
  %v483 = vadd.f32 %v482, 1.0
  %v484 = vrcp.pop %v483
  %v485 = vtanh.pop %v473
  %v486 = vsub.f32 0.0, %v474
  %v487 = vmul.f32 %v486, 1.442695
  %v488 = vpow.pop %v487
  %v489 = vadd.f32 %v488, 1.0
  %v490 = vrcp.pop %v489
  %v491 = vmul.f32 %v484, %v394
  %v492 = vmul.f32 %v479, %v485
  %v493 = vadd.f32 %v491, %v492
  %v494 = vtanh.pop %v493
  %v495 = vmul.f32 %v490, %v494
  %s496 = sadd.s32 %s14, 2
  %v497 = vstv %s496
  %vm498 = vcmp.lt.s32.totalorder %v497, %v53
  %v499 = vsel %vm498, 1, 0
  %v500 = vcvt.s32.f32 %v499
  %502 = vset.pattern.permute.xlu0 0
  %503 = vperm.xlu0 %502, %v500
  %v504 = vpop.permute.xlu0 %503
  %v506 = vmul.f32 %v495, %v504
  %v507 = vpack.c.bf16 %v506, %v506
  %s508 = scalar_lea.vmem %s3, 8
  %509 = vst [vmem:[%s508] sm:$0xf] %v507
  %s510 = scalar_lea.vmem %s0, 48
  %v511 = vld [vmem:[%s510] sm:$0xff]
  %v512 = vld [vmem:[%s510 + $0x8] sm:$0xff]
  %v513 = vunpack.c.l.bf16 %v511
  %v514 = vunpack.c.h.bf16 %v511
  %v515 = vunpack.c.l.bf16 %v512
  %v516 = vunpack.c.h.bf16 %v512
  %v517 = vpack.c.bf16 %v495, %v495
  %518 = vmatpush.bf16.msra.mxu0 %v187
  %519 = vmatpush.bf16.msra.mxu0 %v183
  %520 = vmatpush.bf16.msra.mxu0 %v179
  %521 = vmatpush.bf16.msra.mxu0 %v175
  %522 = vmatpush.bf16.msra.mxu0 %v171
  %523 = vmatpush.bf16.msra.mxu0 %v167
  %524 = vmatpush.bf16.msra.mxu0 %v163
  %525 = vmatpush.bf16.msra.mxu0 %v159
  %526 = vmatmul.bf16.gmra.mxu0 %v517
  %v527 = vpop.f32.mrf.mxu0
  %v528 = vadd.f32 0.0, %v527
  %v529 = vpop.f32.mrf.mxu0
  %530 = vdwg.mxu0
  %531 = vmatpush.bf16.msra.mxu0 %v188
  %532 = vmatpush.bf16.msra.mxu0 %v184
  %533 = vmatpush.bf16.msra.mxu0 %v180
  %534 = vmatpush.bf16.msra.mxu0 %v176
  %535 = vmatpush.bf16.msra.mxu0 %v172
  %536 = vmatpush.bf16.msra.mxu0 %v168
  %537 = vmatpush.bf16.msra.mxu0 %v164
  %538 = vmatpush.bf16.msra.mxu0 %v160
  %539 = vmatmul.bf16.gmra.mxu0 %v517
  %v540 = vpop.f32.mrf.mxu0
  %v541 = vadd.f32 0.0, %v540
  %v542 = vpop.f32.mrf.mxu0
  %543 = vdwg.mxu0
  %544 = vmatpush.bf16.msra.mxu0 %v189
  %545 = vmatpush.bf16.msra.mxu0 %v185
  %546 = vmatpush.bf16.msra.mxu0 %v181
  %547 = vmatpush.bf16.msra.mxu0 %v177
  %548 = vmatpush.bf16.msra.mxu0 %v173
  %549 = vmatpush.bf16.msra.mxu0 %v169
  %550 = vmatpush.bf16.msra.mxu0 %v165
  %551 = vmatpush.bf16.msra.mxu0 %v161
  %552 = vmatmul.bf16.gmra.mxu0 %v517
  %v553 = vpop.f32.mrf.mxu0
  %v554 = vadd.f32 0.0, %v553
  %v555 = vpop.f32.mrf.mxu0
  %556 = vdwg.mxu0
  %557 = vmatpush.bf16.msra.mxu0 %v190
  %558 = vmatpush.bf16.msra.mxu0 %v186
  %559 = vmatpush.bf16.msra.mxu0 %v182
  %560 = vmatpush.bf16.msra.mxu0 %v178
  %561 = vmatpush.bf16.msra.mxu0 %v174
  %562 = vmatpush.bf16.msra.mxu0 %v170
  %563 = vmatpush.bf16.msra.mxu0 %v166
  %564 = vmatpush.bf16.msra.mxu0 %v162
  %565 = vmatmul.bf16.gmra.mxu0 %v517
  %v566 = vpop.f32.mrf.mxu0
  %v567 = vadd.f32 0.0, %v566
  %v568 = vpop.f32.mrf.mxu0
  %569 = vdwg.mxu0
  %v570 = vadd.f32 %v513, %v528
  %v571 = vadd.f32 %v514, %v541
  %v572 = vadd.f32 %v515, %v554
  %v573 = vadd.f32 %v516, %v567
  %v574 = vsub.f32 0.0, %v570
  %v575 = vmul.f32 %v574, 1.442695
  %v576 = vpow.pop %v575
  %v577 = vadd.f32 %v576, 1.0
  %v578 = vrcp.pop %v577
  %v579 = vsub.f32 0.0, %v571
  %v580 = vmul.f32 %v579, 1.442695
  %v581 = vpow.pop %v580
  %v582 = vadd.f32 %v581, 1.0
  %v583 = vrcp.pop %v582
  %v584 = vtanh.pop %v572
  %v585 = vsub.f32 0.0, %v573
  %v586 = vmul.f32 %v585, 1.442695
  %v587 = vpow.pop %v586
  %v588 = vadd.f32 %v587, 1.0
  %v589 = vrcp.pop %v588
  %v590 = vmul.f32 %v583, %v493
  %v591 = vmul.f32 %v578, %v584
  %v592 = vadd.f32 %v590, %v591
  %v593 = vtanh.pop %v592
  %v594 = vmul.f32 %v589, %v593
  %s595 = sadd.s32 %s14, 3
  %v596 = vstv %s595
  %vm597 = vcmp.lt.s32.totalorder %v596, %v53
  %v598 = vsel %vm597, 1, 0
  %v599 = vcvt.s32.f32 %v598
  %601 = vset.pattern.permute.xlu0 0
  %602 = vperm.xlu0 %601, %v599
  %v603 = vpop.permute.xlu0 %602
  %v605 = vmul.f32 %v594, %v603
  %v606 = vpack.c.bf16 %v605, %v605
  %s607 = scalar_lea.vmem %s3, 12
  %608 = vst [vmem:[%s607] sm:$0xf] %v606
  %s609 = scalar_lea.vmem %s0, 64
  %v610 = vld [vmem:[%s609] sm:$0xff]
  %v611 = vld [vmem:[%s609 + $0x8] sm:$0xff]
  %v612 = vunpack.c.l.bf16 %v610
  %v613 = vunpack.c.h.bf16 %v610
  %v614 = vunpack.c.l.bf16 %v611
  %v615 = vunpack.c.h.bf16 %v611
  %v616 = vpack.c.bf16 %v594, %v594
  %617 = vmatpush.bf16.msra.mxu0 %v187
  %618 = vmatpush.bf16.msra.mxu0 %v183
  %619 = vmatpush.bf16.msra.mxu0 %v179
  %620 = vmatpush.bf16.msra.mxu0 %v175
  %621 = vmatpush.bf16.msra.mxu0 %v171
  %622 = vmatpush.bf16.msra.mxu0 %v167
  %623 = vmatpush.bf16.msra.mxu0 %v163
  %624 = vmatpush.bf16.msra.mxu0 %v159
  %625 = vmatmul.bf16.gmra.mxu0 %v616
  %v626 = vpop.f32.mrf.mxu0
  %v627 = vadd.f32 0.0, %v626
  %v628 = vpop.f32.mrf.mxu0
  %629 = vdwg.mxu0
  %630 = vmatpush.bf16.msra.mxu0 %v188
  %631 = vmatpush.bf16.msra.mxu0 %v184
  %632 = vmatpush.bf16.msra.mxu0 %v180
  %633 = vmatpush.bf16.msra.mxu0 %v176
  %634 = vmatpush.bf16.msra.mxu0 %v172
  %635 = vmatpush.bf16.msra.mxu0 %v168
  %636 = vmatpush.bf16.msra.mxu0 %v164
  %637 = vmatpush.bf16.msra.mxu0 %v160
  %638 = vmatmul.bf16.gmra.mxu0 %v616
  %v639 = vpop.f32.mrf.mxu0
  %v640 = vadd.f32 0.0, %v639
  %v641 = vpop.f32.mrf.mxu0
  %642 = vdwg.mxu0
  %643 = vmatpush.bf16.msra.mxu0 %v189
  %644 = vmatpush.bf16.msra.mxu0 %v185
  %645 = vmatpush.bf16.msra.mxu0 %v181
  %646 = vmatpush.bf16.msra.mxu0 %v177
  %647 = vmatpush.bf16.msra.mxu0 %v173
  %648 = vmatpush.bf16.msra.mxu0 %v169
  %649 = vmatpush.bf16.msra.mxu0 %v165
  %650 = vmatpush.bf16.msra.mxu0 %v161
  %651 = vmatmul.bf16.gmra.mxu0 %v616
  %v652 = vpop.f32.mrf.mxu0
  %v653 = vadd.f32 0.0, %v652
  %v654 = vpop.f32.mrf.mxu0
  %655 = vdwg.mxu0
  %656 = vmatpush.bf16.msra.mxu0 %v190
  %657 = vmatpush.bf16.msra.mxu0 %v186
  %658 = vmatpush.bf16.msra.mxu0 %v182
  %659 = vmatpush.bf16.msra.mxu0 %v178
  %660 = vmatpush.bf16.msra.mxu0 %v174
  %661 = vmatpush.bf16.msra.mxu0 %v170
  %662 = vmatpush.bf16.msra.mxu0 %v166
  %663 = vmatpush.bf16.msra.mxu0 %v162
  %664 = vmatmul.bf16.gmra.mxu0 %v616
  %v665 = vpop.f32.mrf.mxu0
  %v666 = vadd.f32 0.0, %v665
  %v667 = vpop.f32.mrf.mxu0
  %668 = vdwg.mxu0
  %v669 = vadd.f32 %v612, %v627
  %v670 = vadd.f32 %v613, %v640
  %v671 = vadd.f32 %v614, %v653
  %v672 = vadd.f32 %v615, %v666
  %v673 = vsub.f32 0.0, %v669
  %v674 = vmul.f32 %v673, 1.442695
  %v675 = vpow.pop %v674
  %v676 = vadd.f32 %v675, 1.0
  %v677 = vrcp.pop %v676
  %v678 = vsub.f32 0.0, %v670
  %v679 = vmul.f32 %v678, 1.442695
  %v680 = vpow.pop %v679
  %v681 = vadd.f32 %v680, 1.0
  %v682 = vrcp.pop %v681
  %v683 = vtanh.pop %v671
  %v684 = vsub.f32 0.0, %v672
  %v685 = vmul.f32 %v684, 1.442695
  %v686 = vpow.pop %v685
  %v687 = vadd.f32 %v686, 1.0
  %v688 = vrcp.pop %v687
  %v689 = vmul.f32 %v682, %v592
  %v690 = vmul.f32 %v677, %v683
  %v691 = vadd.f32 %v689, %v690
  %v692 = vtanh.pop %v691
  %v693 = vmul.f32 %v688, %v692
  %s694 = sadd.s32 %s14, 4
  %v695 = vstv %s694
  %vm696 = vcmp.lt.s32.totalorder %v695, %v53
  %v697 = vsel %vm696, 1, 0
  %v698 = vcvt.s32.f32 %v697
  %700 = vset.pattern.permute.xlu0 0
  %701 = vperm.xlu0 %700, %v698
  %v702 = vpop.permute.xlu0 %701
  %v704 = vmul.f32 %v693, %v702
  %v705 = vpack.c.bf16 %v704, %v704
  %s706 = scalar_lea.vmem %s3, 16
  %707 = vst [vmem:[%s706] sm:$0xf] %v705
  %s708 = scalar_lea.vmem %s0, 80
  %v709 = vld [vmem:[%s708] sm:$0xff]
  %v710 = vld [vmem:[%s708 + $0x8] sm:$0xff]
  %v711 = vunpack.c.l.bf16 %v709
  %v712 = vunpack.c.h.bf16 %v709
  %v713 = vunpack.c.l.bf16 %v710
  %v714 = vunpack.c.h.bf16 %v710
  %v715 = vpack.c.bf16 %v693, %v693
  %716 = vmatpush.bf16.msra.mxu0 %v187
  %717 = vmatpush.bf16.msra.mxu0 %v183
  %718 = vmatpush.bf16.msra.mxu0 %v179
  %719 = vmatpush.bf16.msra.mxu0 %v175
  %720 = vmatpush.bf16.msra.mxu0 %v171
  %721 = vmatpush.bf16.msra.mxu0 %v167
  %722 = vmatpush.bf16.msra.mxu0 %v163
  %723 = vmatpush.bf16.msra.mxu0 %v159
  %724 = vmatmul.bf16.gmra.mxu0 %v715
  %v725 = vpop.f32.mrf.mxu0
  %v726 = vadd.f32 0.0, %v725
  %v727 = vpop.f32.mrf.mxu0
  %728 = vdwg.mxu0
  %729 = vmatpush.bf16.msra.mxu0 %v188
  %730 = vmatpush.bf16.msra.mxu0 %v184
  %731 = vmatpush.bf16.msra.mxu0 %v180
  %732 = vmatpush.bf16.msra.mxu0 %v176
  %733 = vmatpush.bf16.msra.mxu0 %v172
  %734 = vmatpush.bf16.msra.mxu0 %v168
  %735 = vmatpush.bf16.msra.mxu0 %v164
  %736 = vmatpush.bf16.msra.mxu0 %v160
  %737 = vmatmul.bf16.gmra.mxu0 %v715
  %v738 = vpop.f32.mrf.mxu0
  %v739 = vadd.f32 0.0, %v738
  %v740 = vpop.f32.mrf.mxu0
  %741 = vdwg.mxu0
  %742 = vmatpush.bf16.msra.mxu0 %v189
  %743 = vmatpush.bf16.msra.mxu0 %v185
  %744 = vmatpush.bf16.msra.mxu0 %v181
  %745 = vmatpush.bf16.msra.mxu0 %v177
  %746 = vmatpush.bf16.msra.mxu0 %v173
  %747 = vmatpush.bf16.msra.mxu0 %v169
  %748 = vmatpush.bf16.msra.mxu0 %v165
  %749 = vmatpush.bf16.msra.mxu0 %v161
  %750 = vmatmul.bf16.gmra.mxu0 %v715
  %v751 = vpop.f32.mrf.mxu0
  %v752 = vadd.f32 0.0, %v751
  %v753 = vpop.f32.mrf.mxu0
  %754 = vdwg.mxu0
  %755 = vmatpush.bf16.msra.mxu0 %v190
  %756 = vmatpush.bf16.msra.mxu0 %v186
  %757 = vmatpush.bf16.msra.mxu0 %v182
  %758 = vmatpush.bf16.msra.mxu0 %v178
  %759 = vmatpush.bf16.msra.mxu0 %v174
  %760 = vmatpush.bf16.msra.mxu0 %v170
  %761 = vmatpush.bf16.msra.mxu0 %v166
  %762 = vmatpush.bf16.msra.mxu0 %v162
  %763 = vmatmul.bf16.gmra.mxu0 %v715
  %v764 = vpop.f32.mrf.mxu0
  %v765 = vadd.f32 0.0, %v764
  %v766 = vpop.f32.mrf.mxu0
  %767 = vdwg.mxu0
  %v768 = vadd.f32 %v711, %v726
  %v769 = vadd.f32 %v712, %v739
  %v770 = vadd.f32 %v713, %v752
  %v771 = vadd.f32 %v714, %v765
  %v772 = vsub.f32 0.0, %v768
  %v773 = vmul.f32 %v772, 1.442695
  %v774 = vpow.pop %v773
  %v775 = vadd.f32 %v774, 1.0
  %v776 = vrcp.pop %v775
  %v777 = vsub.f32 0.0, %v769
  %v778 = vmul.f32 %v777, 1.442695
  %v779 = vpow.pop %v778
  %v780 = vadd.f32 %v779, 1.0
  %v781 = vrcp.pop %v780
  %v782 = vtanh.pop %v770
  %v783 = vsub.f32 0.0, %v771
  %v784 = vmul.f32 %v783, 1.442695
  %v785 = vpow.pop %v784
  %v786 = vadd.f32 %v785, 1.0
  %v787 = vrcp.pop %v786
  %v788 = vmul.f32 %v781, %v691
  %v789 = vmul.f32 %v776, %v782
  %v790 = vadd.f32 %v788, %v789
  %v791 = vtanh.pop %v790
  %v792 = vmul.f32 %v787, %v791
  %s793 = sadd.s32 %s14, 5
  %v794 = vstv %s793
  %vm795 = vcmp.lt.s32.totalorder %v794, %v53
  %v796 = vsel %vm795, 1, 0
  %v797 = vcvt.s32.f32 %v796
  %799 = vset.pattern.permute.xlu0 0
  %800 = vperm.xlu0 %799, %v797
  %v801 = vpop.permute.xlu0 %800
  %v803 = vmul.f32 %v792, %v801
  %v804 = vpack.c.bf16 %v803, %v803
  %s805 = scalar_lea.vmem %s3, 20
  %806 = vst [vmem:[%s805] sm:$0xf] %v804
  %s807 = scalar_lea.vmem %s0, 96
  %v808 = vld [vmem:[%s807] sm:$0xff]
  %v809 = vld [vmem:[%s807 + $0x8] sm:$0xff]
  %v810 = vunpack.c.l.bf16 %v808
  %v811 = vunpack.c.h.bf16 %v808
  %v812 = vunpack.c.l.bf16 %v809
  %v813 = vunpack.c.h.bf16 %v809
  %v814 = vpack.c.bf16 %v792, %v792
  %815 = vmatpush.bf16.msra.mxu0 %v187
  %816 = vmatpush.bf16.msra.mxu0 %v183
  %817 = vmatpush.bf16.msra.mxu0 %v179
  %818 = vmatpush.bf16.msra.mxu0 %v175
  %819 = vmatpush.bf16.msra.mxu0 %v171
  %820 = vmatpush.bf16.msra.mxu0 %v167
  %821 = vmatpush.bf16.msra.mxu0 %v163
  %822 = vmatpush.bf16.msra.mxu0 %v159
  %823 = vmatmul.bf16.gmra.mxu0 %v814
  %v824 = vpop.f32.mrf.mxu0
  %v825 = vadd.f32 0.0, %v824
  %v826 = vpop.f32.mrf.mxu0
  %827 = vdwg.mxu0
  %828 = vmatpush.bf16.msra.mxu0 %v188
  %829 = vmatpush.bf16.msra.mxu0 %v184
  %830 = vmatpush.bf16.msra.mxu0 %v180
  %831 = vmatpush.bf16.msra.mxu0 %v176
  %832 = vmatpush.bf16.msra.mxu0 %v172
  %833 = vmatpush.bf16.msra.mxu0 %v168
  %834 = vmatpush.bf16.msra.mxu0 %v164
  %835 = vmatpush.bf16.msra.mxu0 %v160
  %836 = vmatmul.bf16.gmra.mxu0 %v814
  %v837 = vpop.f32.mrf.mxu0
  %v838 = vadd.f32 0.0, %v837
  %v839 = vpop.f32.mrf.mxu0
  %840 = vdwg.mxu0
  %841 = vmatpush.bf16.msra.mxu0 %v189
  %842 = vmatpush.bf16.msra.mxu0 %v185
  %843 = vmatpush.bf16.msra.mxu0 %v181
  %844 = vmatpush.bf16.msra.mxu0 %v177
  %845 = vmatpush.bf16.msra.mxu0 %v173
  %846 = vmatpush.bf16.msra.mxu0 %v169
  %847 = vmatpush.bf16.msra.mxu0 %v165
  %848 = vmatpush.bf16.msra.mxu0 %v161
  %849 = vmatmul.bf16.gmra.mxu0 %v814
  %v850 = vpop.f32.mrf.mxu0
  %v851 = vadd.f32 0.0, %v850
  %v852 = vpop.f32.mrf.mxu0
  %853 = vdwg.mxu0
  %854 = vmatpush.bf16.msra.mxu0 %v190
  %855 = vmatpush.bf16.msra.mxu0 %v186
  %856 = vmatpush.bf16.msra.mxu0 %v182
  %857 = vmatpush.bf16.msra.mxu0 %v178
  %858 = vmatpush.bf16.msra.mxu0 %v174
  %859 = vmatpush.bf16.msra.mxu0 %v170
  %860 = vmatpush.bf16.msra.mxu0 %v166
  %861 = vmatpush.bf16.msra.mxu0 %v162
  %862 = vmatmul.bf16.gmra.mxu0 %v814
  %v863 = vpop.f32.mrf.mxu0
  %v864 = vadd.f32 0.0, %v863
  %v865 = vpop.f32.mrf.mxu0
  %866 = vdwg.mxu0
  %v867 = vadd.f32 %v810, %v825
  %v868 = vadd.f32 %v811, %v838
  %v869 = vadd.f32 %v812, %v851
  %v870 = vadd.f32 %v813, %v864
  %v871 = vsub.f32 0.0, %v867
  %v872 = vmul.f32 %v871, 1.442695
  %v873 = vpow.pop %v872
  %v874 = vadd.f32 %v873, 1.0
  %v875 = vrcp.pop %v874
  %v876 = vsub.f32 0.0, %v868
  %v877 = vmul.f32 %v876, 1.442695
  %v878 = vpow.pop %v877
  %v879 = vadd.f32 %v878, 1.0
  %v880 = vrcp.pop %v879
  %v881 = vtanh.pop %v869
  %v882 = vsub.f32 0.0, %v870
  %v883 = vmul.f32 %v882, 1.442695
  %v884 = vpow.pop %v883
  %v885 = vadd.f32 %v884, 1.0
  %v886 = vrcp.pop %v885
  %v887 = vmul.f32 %v880, %v790
  %v888 = vmul.f32 %v875, %v881
  %v889 = vadd.f32 %v887, %v888
  %v890 = vtanh.pop %v889
  %v891 = vmul.f32 %v886, %v890
  %s892 = sadd.s32 %s14, 6
  %v893 = vstv %s892
  %vm894 = vcmp.lt.s32.totalorder %v893, %v53
  %v895 = vsel %vm894, 1, 0
  %v896 = vcvt.s32.f32 %v895
  %898 = vset.pattern.permute.xlu0 0
  %899 = vperm.xlu0 %898, %v896
  %v900 = vpop.permute.xlu0 %899
  %v902 = vmul.f32 %v891, %v900
  %v903 = vpack.c.bf16 %v902, %v902
  %s904 = scalar_lea.vmem %s3, 24
  %905 = vst [vmem:[%s904] sm:$0xf] %v903
  %s906 = scalar_lea.vmem %s0, 112
  %v907 = vld [vmem:[%s906] sm:$0xff]
  %v908 = vld [vmem:[%s906 + $0x8] sm:$0xff]
  %v909 = vunpack.c.l.bf16 %v907
  %v910 = vunpack.c.h.bf16 %v907
  %v911 = vunpack.c.l.bf16 %v908
  %v912 = vunpack.c.h.bf16 %v908
  %v913 = vpack.c.bf16 %v891, %v891
  %914 = vmatpush.bf16.msra.mxu0 %v187
  %915 = vmatpush.bf16.msra.mxu0 %v183
  %916 = vmatpush.bf16.msra.mxu0 %v179
  %917 = vmatpush.bf16.msra.mxu0 %v175
  %918 = vmatpush.bf16.msra.mxu0 %v171
  %919 = vmatpush.bf16.msra.mxu0 %v167
  %920 = vmatpush.bf16.msra.mxu0 %v163
  %921 = vmatpush.bf16.msra.mxu0 %v159
  %922 = vmatmul.bf16.gmra.mxu0 %v913
  %v923 = vpop.f32.mrf.mxu0
  %v924 = vadd.f32 0.0, %v923
  %v925 = vpop.f32.mrf.mxu0
  %926 = vdwg.mxu0
  %927 = vmatpush.bf16.msra.mxu0 %v188
  %928 = vmatpush.bf16.msra.mxu0 %v184
  %929 = vmatpush.bf16.msra.mxu0 %v180
  %930 = vmatpush.bf16.msra.mxu0 %v176
  %931 = vmatpush.bf16.msra.mxu0 %v172
  %932 = vmatpush.bf16.msra.mxu0 %v168
  %933 = vmatpush.bf16.msra.mxu0 %v164
  %934 = vmatpush.bf16.msra.mxu0 %v160
  %935 = vmatmul.bf16.gmra.mxu0 %v913
  %v936 = vpop.f32.mrf.mxu0
  %v937 = vadd.f32 0.0, %v936
  %v938 = vpop.f32.mrf.mxu0
  %939 = vdwg.mxu0
  %940 = vmatpush.bf16.msra.mxu0 %v189
  %941 = vmatpush.bf16.msra.mxu0 %v185
  %942 = vmatpush.bf16.msra.mxu0 %v181
  %943 = vmatpush.bf16.msra.mxu0 %v177
  %944 = vmatpush.bf16.msra.mxu0 %v173
  %945 = vmatpush.bf16.msra.mxu0 %v169
  %946 = vmatpush.bf16.msra.mxu0 %v165
  %947 = vmatpush.bf16.msra.mxu0 %v161
  %948 = vmatmul.bf16.gmra.mxu0 %v913
  %v949 = vpop.f32.mrf.mxu0
  %v950 = vadd.f32 0.0, %v949
  %v951 = vpop.f32.mrf.mxu0
  %952 = vdwg.mxu0
  %953 = vmatpush.bf16.msra.mxu0 %v190
  %954 = vmatpush.bf16.msra.mxu0 %v186
  %955 = vmatpush.bf16.msra.mxu0 %v182
  %956 = vmatpush.bf16.msra.mxu0 %v178
  %957 = vmatpush.bf16.msra.mxu0 %v174
  %958 = vmatpush.bf16.msra.mxu0 %v170
  %959 = vmatpush.bf16.msra.mxu0 %v166
  %960 = vmatpush.bf16.msra.mxu0 %v162
  %961 = vmatmul.bf16.gmra.mxu0 %v913
  %v962 = vpop.f32.mrf.mxu0
  %v963 = vadd.f32 0.0, %v962
  %v964 = vpop.f32.mrf.mxu0
  %965 = vdwg.mxu0
  %v966 = vadd.f32 %v909, %v924
  %v967 = vadd.f32 %v910, %v937
  %v968 = vadd.f32 %v911, %v950
  %v969 = vadd.f32 %v912, %v963
  %v970 = vsub.f32 0.0, %v966
  %v971 = vmul.f32 %v970, 1.442695
  %v972 = vpow.pop %v971
  %v973 = vadd.f32 %v972, 1.0
  %v974 = vrcp.pop %v973
  %v975 = vsub.f32 0.0, %v967
  %v976 = vmul.f32 %v975, 1.442695
  %v977 = vpow.pop %v976
  %v978 = vadd.f32 %v977, 1.0
  %v979 = vrcp.pop %v978
  %v980 = vtanh.pop %v968
  %v981 = vsub.f32 0.0, %v969
  %v982 = vmul.f32 %v981, 1.442695
  %v983 = vpow.pop %v982
  %v984 = vadd.f32 %v983, 1.0
  %v985 = vrcp.pop %v984
  %v986 = vmul.f32 %v979, %v889
  %v987 = vmul.f32 %v974, %v980
  %v988 = vadd.f32 %v986, %v987
  %v989 = vtanh.pop %v988
  %v990 = vmul.f32 %v985, %v989
  %s991 = sadd.s32 %s14, 7
  %v992 = vstv %s991
  %vm993 = vcmp.lt.s32.totalorder %v992, %v53
  %v994 = vsel %vm993, 1, 0
  %v995 = vcvt.s32.f32 %v994
  %997 = vset.pattern.permute.xlu0 0
  %998 = vperm.xlu0 %997, %v995
  %v999 = vpop.permute.xlu0 %998
  %v1001 = vmul.f32 %v990, %v999
  %v1002 = vpack.c.bf16 %v1001, %v1001
  %s1003 = scalar_lea.vmem %s3, 28
  %1004 = vst [vmem:[%s1003] sm:$0xf] %v1002
  %1005 = vst [vmem:[#allocation2] sm:$0xff] %v990
  %1006 = vst [vmem:[#allocation3] sm:$0xff] %v988
  // Predicated region
  $region18: #{elmo_lstm_encoder.4} parent=0 // pred_check
    _
  $region19: #{elmo_lstm_encoder.4} parent=0 // pred_check_branch
    %1008 = sbr.rel (0) target = $region21
  $region20: #{elmo_lstm_encoder.4} parent=0 // pred_region
    _
  $region21: #{elmo_lstm_encoder.4} parent=0 // pred_fallthru
    _
  // Predicated region
  $region22: #{elmo_lstm_encoder.4} parent=0 // pred_check
    _
  $region23: #{elmo_lstm_encoder.4} parent=0 // pred_check_branch
    %1010 = sbr.rel (0) target = $region25
  $region24: #{elmo_lstm_encoder.4} parent=0 // pred_region
    _
  $region25: #{elmo_lstm_encoder.4} parent=0 // pred_fallthru
    _

</llo_original>
